<compile_context>
chip_gen: v7x
topology: tpu7x:2x2x1
jax: 0.10.0
libtpu: 0.0.40
codegen_flags: <defaults>
</compile_context>

<pallas_src>
import functools

import jax
import jax.numpy as jnp
from jax.experimental import pallas as pl
from jax.experimental.pallas import tpu as pltpu


def _round_up(x, m):
    return ((x + m - 1) // m) * m


# ---------------------------------------------------------------------------
# Fused kernel
# ---------------------------------------------------------------------------

def _tcn_fused_kernel(*refs, K, dilations, has_downsample, pad_rows):
    """Whole TCN forward for one batch tile (batch folded into matmul M).

    refs = (x_ref, *param_refs, o_ref, buf_ref)
      x_ref : (Bt, L, C_PAD) f32   lane-dense input
      params: per block [w1, b1, w2, b2, (wd, bd)?], then [linear_w, linear_b];
              conv weights pre-flattened (K*C_PAD, C_PAD) bf16, biases (1,C) f32
      o_ref : (Bt, L, O_PAD) f32
      buf   : (Bt, pad_rows + L, C_PAD) bf16 scratch — causal-padded staging
              buffer for the im2col taps (head rows are the causal zeros).
    """
    x_ref, o_ref, buf = refs[0], refs[-2], refs[-1]
    params = refs[1:-2]

    Bt, L, C = x_ref.shape
    M = Bt * L

    # Zero the causal head once; every later write only touches rows >= pad_rows.
    buf[:, :pad_rows, :] = jnp.zeros((Bt, pad_rows, C), jnp.bfloat16)

    def dilated_conv(w_ref, dilation):
        # out[b, t] = sum_k w[k] . staged[b, t - (K-1-k)*dilation]
        taps = [
            buf[:, pad_rows - (K - 1 - k) * dilation:
                   pad_rows - (K - 1 - k) * dilation + L, :]
            for k in range(K)
        ]
        # Lane concat of full-128-lane tiles (tile aligned) -> one MXU matmul.
        cols = jnp.concatenate(taps, axis=-1) if K > 1 else taps[0]
        return jnp.dot(cols.reshape(M, K * C), w_ref[...],
                       preferred_element_type=jnp.float32)

    h = x_ref[...].astype(jnp.float32).reshape(M, C)     # running activation, f32

    idx = 0
    for dilation, has_ds in zip(dilations, has_downsample):
        w1, b1, w2, b2 = params[idx:idx + 4]
        idx += 4

        h_bf16 = h.astype(jnp.bfloat16)                   # cast once per block in

        # Residual path (1x1 conv when channel counts differ), f32 accumulate.
        if has_ds:
            wd, bd = params[idx:idx + 2]
            idx += 2
            res = jnp.dot(h_bf16, wd[...],
                          preferred_element_type=jnp.float32) + bd[...]
        else:
            res = h

        # conv1 -> chomp -> relu   (dropout = identity, eval mode)
        buf[:, pad_rows:, :] = h_bf16.reshape(Bt, L, C)
        y = jnp.maximum(dilated_conv(w1, dilation) + b1[...], 0.0)
        # conv2 -> chomp -> relu
        buf[:, pad_rows:, :] = y.astype(jnp.bfloat16).reshape(Bt, L, C)
        y = jnp.maximum(dilated_conv(w2, dilation) + b2[...], 0.0)
        # block output: relu(out + res)
        h = jnp.maximum(y + res, 0.0)

    # Final linear + sigmoid (.double() omitted — see header TODO).
    wl, bl = params[idx], params[idx + 1]
    out = jnp.dot(h.astype(jnp.bfloat16), wl[...],
                  preferred_element_type=jnp.float32) + bl[...]
    o_ref[...] = jax.nn.sigmoid(out).reshape(Bt, L, -1).astype(o_ref.dtype)


# ---------------------------------------------------------------------------
# Wrapper around a single pallas_call
# ---------------------------------------------------------------------------

def tcn_forward(params, x, kernel_size, *, batch_tile=None):
    """x: (B, L, input_size) f32 -> sigmoid output (B, L, output_size) f32."""
    B, L, C_in = x.shape
    C_PAD = params["c_pad"]
    O_PAD = params["o_pad"]
    output_size = params["output_size"]
    n_blocks = len(params["blocks"])
    dilations = tuple(2 ** i for i in range(n_blocks))
    has_downsample = tuple(blk["has_downsample"] for blk in params["blocks"])

    # Lane-dense input: pad channels to C_PAD once, outside the kernel.
    if C_in < C_PAD:
        x = jnp.pad(x, ((0, 0), (0, 0), (0, C_PAD - C_in)))

    flat_params = []
    for blk in params["blocks"]:
        flat_params += [blk["w1"], blk["b1"], blk["w2"], blk["b2"]]
        if blk["has_downsample"]:
            flat_params += [blk["wd"], blk["bd"]]
    flat_params += [params["linear_w"], params["linear_b"]]

    # Default: whole batch folded into one matmul (grid of 1 step).
    # v7x: pass batch_tile = B // 2 to split the batch over both TensorCores.
    bt = B if batch_tile is None else batch_tile
    assert B % bt == 0, (B, bt)
    grid = (B // bt,)

    # Causal-pad scratch rows: cover the largest dilation, rounded to the bf16
    # sublane tile (16) so the staged activation sits on a tile boundary.
    max_pad = (kernel_size - 1) * dilations[-1]
    pad_rows = max(16, _round_up(max_pad, 16))

    kernel = functools.partial(
        _tcn_fused_kernel, K=kernel_size, dilations=dilations,
        has_downsample=has_downsample, pad_rows=pad_rows)

    def _const_spec(shape):
        """Full-array block, identical for every grid step (DMA'd once)."""
        nd = len(shape)
        return pl.BlockSpec(shape, lambda i, _nd=nd: (0,) * _nd)

    in_specs = [pl.BlockSpec((bt, L, C_PAD), lambda i: (i, 0, 0))]
    in_specs += [_const_spec(p.shape) for p in flat_params]
    out_specs = pl.BlockSpec((bt, L, O_PAD), lambda i: (i, 0, 0))

    # Cost estimate (lets XLA schedule the fused call sensibly).
    M_tot = B * L
    flops = 0
    for blk in params["blocks"]:
        flops += 2 * (2 * M_tot * (kernel_size * C_PAD) * C_PAD)   # conv1 + conv2
        if blk["has_downsample"]:
            flops += 2 * M_tot * C_PAD * C_PAD
    flops += 2 * M_tot * C_PAD * O_PAD
    param_bytes = sum(int(p.size) * p.dtype.itemsize for p in flat_params)
    bytes_accessed = int(x.size) * 4 + M_tot * O_PAD * 4 + param_bytes
    cost = pl.CostEstimate(flops=flops, transcendentals=M_tot * O_PAD,
                           bytes_accessed=bytes_accessed)

    # Explicit VMEM budget: (double-buffered) params + I/O tiles + staging
    # scratch + generous headroom for the f32 activations / im2col slab.
    scratch_bytes = bt * (pad_rows + L) * C_PAD * 2
    io_bytes = bt * L * (C_PAD + O_PAD) * 4
    work_bytes = bt * L * C_PAD * 4 * 8 + bt * L * kernel_size * C_PAD * 2
    vmem_limit = 2 * (param_bytes + io_bytes) + scratch_bytes + 4 * work_bytes
    vmem_limit = int(min(max(vmem_limit, 16 * 1024 * 1024), 64 * 1024 * 1024))

    out = pl.pallas_call(
        kernel,
        out_shape=jax.ShapeDtypeStruct((B, L, O_PAD), jnp.float32),
        grid=grid,
        in_specs=in_specs,
        out_specs=out_specs,
        scratch_shapes=[pltpu.VMEM((bt, pad_rows + L, C_PAD), jnp.bfloat16)],
        compiler_params=pltpu.CompilerParams(
            dimension_semantics=("parallel",),
            vmem_limit_bytes=vmem_limit),
        cost_estimate=cost,
    )(x, *flat_params)

    # Drop padded output lanes outside the kernel (keeps the kernel vst lane-dense).
    return out[..., :output_size]


# ---------------------------------------------------------------------------
# Parameter init (synthetic, mirrors TemporalBlock.init_weights shapes)
# ---------------------------------------------------------------------------

def init_tcn_params(key, input_size, output_size, num_channels, kernel_size):
    """Conv weights ~ N(0, 0.01), biases zero, stored in the kernel's padded /
    flattened layout:
      * every channel dim is zero-padded to C_PAD = round_up(max(channels), 128)
        (O_PAD for the final linear output) so activations are lane-dense;
      * conv weights are flattened to (K*C_PAD, C_PAD) bf16 — a real PyTorch
        (C_out, C_in, K) weight maps by zero-padding to (C_PAD, C_PAD, K) and
        then w.transpose(2, 1, 0).reshape(K*C_PAD, C_PAD).
    """
    c_pad = _round_up(max(input_size, max(num_channels)), 128)
    o_pad = _round_up(output_size, 128)

    def conv_weight(k, in_c, out_c):
        w = 0.01 * jax.random.normal(k, (kernel_size, in_c, out_c), jnp.float32)
        w_full = jnp.zeros((kernel_size, c_pad, c_pad), jnp.float32)
        w_full = w_full.at[:, :in_c, :out_c].set(w)
        return w_full.reshape(kernel_size * c_pad, c_pad).astype(jnp.bfloat16)

    blocks = []
    for i, out_c in enumerate(num_channels):
        in_c = input_size if i == 0 else num_channels[i - 1]
        key, k1, k2, k3 = jax.random.split(key, 4)
        blk = {
            "w1": conv_weight(k1, in_c, out_c),
            "b1": jnp.zeros((1, c_pad), jnp.float32),
            "w2": conv_weight(k2, out_c, out_c),
            "b2": jnp.zeros((1, c_pad), jnp.float32),
            "has_downsample": in_c != out_c,
        }
        if in_c != out_c:
            wd = 0.01 * jax.random.normal(k3, (in_c, out_c), jnp.float32)
            wd_full = jnp.zeros((c_pad, c_pad), jnp.float32).at[:in_c, :out_c].set(wd)
            blk["wd"] = wd_full.astype(jnp.bfloat16)
            blk["bd"] = jnp.zeros((1, c_pad), jnp.float32)
        blocks.append(blk)

    key, kl = jax.random.split(key)
    c_last = num_channels[-1]
    bound = 1.0 / (c_last ** 0.5)
    wl = jax.random.uniform(kl, (c_last, output_size), jnp.float32,
                            minval=-bound, maxval=bound)
    wl_full = jnp.zeros((c_pad, o_pad), jnp.float32).at[:c_last, :output_size].set(wl)

    return {
        "blocks": blocks,
        "linear_w": wl_full.astype(jnp.bfloat16),
        "linear_b": jnp.zeros((1, o_pad), jnp.float32),
        "c_pad": c_pad,
        "o_pad": o_pad,
        "output_size": output_size,
    }


# ---------------------------------------------------------------------------
# Pure-JAX f32 reference (same padded weights), for a tolerance check
# ---------------------------------------------------------------------------

def tcn_reference(params, x, kernel_size):
    B, L, C_in = x.shape
    c_pad = params["c_pad"]
    h = jnp.pad(x, ((0, 0), (0, 0), (0, c_pad - C_in))).astype(jnp.float32)

    def conv(h, w_flat, b, dilation):
        pad = (kernel_size - 1) * dilation
        hp = jnp.pad(h, ((0, 0), (pad, 0), (0, 0)))
        cols = jnp.concatenate(
            [hp[:, k * dilation:k * dilation + L, :] for k in range(kernel_size)],
            axis=-1)
        return jnp.einsum("blk,ko->blo", cols, w_flat.astype(jnp.float32)) + b[0]

    for i, blk in enumerate(params["blocks"]):
        d = 2 ** i
        if blk["has_downsample"]:
            res = jnp.einsum("blc,co->blo", h,
                             blk["wd"].astype(jnp.float32)) + blk["bd"][0]
        else:
            res = h
        y = jnp.maximum(conv(h, blk["w1"], blk["b1"], d), 0.0)
        y = jnp.maximum(conv(y, blk["w2"], blk["b2"], d), 0.0)
        h = jnp.maximum(y + res, 0.0)

    out = jnp.einsum("blc,co->blo", h, params["linear_w"].astype(jnp.float32))
    out = out + params["linear_b"][0]
    return jax.nn.sigmoid(out)[..., :params["output_size"]]


# ---------------------------------------------------------------------------
# Main
# ---------------------------------------------------------------------------

if __name__ == "__main__":
    B = 2            # batch
    L = 16           # sequence length
    input_size = 4   # note dimensionality (88 for real poly-music)
    output_size = 4
    num_channels = (8, 8)   # two TemporalBlocks, dilations 1 and 2
    kernel_size = 3

    key = jax.random.PRNGKey(0)
    key, kx = jax.random.split(key)
    x = jax.random.normal(kx, (B, L, input_size), jnp.float32)

    params = init_tcn_params(key, input_size, output_size, num_channels,
                             kernel_size)

    out = tcn_forward(params, x, kernel_size)
    out = jax.block_until_ready(out)

    assert out.shape == (B, L, output_size), out.shape
    assert bool(jnp.all(jnp.isfinite(out)))
    assert bool(jnp.all((out >= 0.0) & (out <= 1.0)))   # sigmoid range

    ref = tcn_reference(params, x, kernel_size)
    max_err = float(jnp.max(jnp.abs(out - ref)))
    assert max_err < 2e-2, f"max |out - ref| = {max_err}"

    print("KERNEL_OK")
</pallas_src>

<mosaic_0001>
module attributes {stable_mosaic.version = 11 : i64} {
  func.func @_tcn_fused_kernel(%arg0: i32, %arg1: memref<2x16x128xf32, #tpu.memory_space<vmem>>, %arg2: memref<384x128xbf16, #tpu.memory_space<vmem>>, %arg3: memref<1x128xf32, #tpu.memory_space<vmem>>, %arg4: memref<384x128xbf16, #tpu.memory_space<vmem>>, %arg5: memref<1x128xf32, #tpu.memory_space<vmem>>, %arg6: memref<128x128xbf16, #tpu.memory_space<vmem>>, %arg7: memref<1x128xf32, #tpu.memory_space<vmem>>, %arg8: memref<384x128xbf16, #tpu.memory_space<vmem>>, %arg9: memref<1x128xf32, #tpu.memory_space<vmem>>, %arg10: memref<384x128xbf16, #tpu.memory_space<vmem>>, %arg11: memref<1x128xf32, #tpu.memory_space<vmem>>, %arg12: memref<128x128xbf16, #tpu.memory_space<vmem>>, %arg13: memref<1x128xf32, #tpu.memory_space<vmem>>, %arg14: memref<2x16x128xf32, #tpu.memory_space<vmem>>, %arg15: memref<2x32x128xbf16, #tpu.memory_space<vmem>>) attributes {dimension_semantics = [#tpu.dimension_semantics<parallel>], iteration_bounds = array<i64: 1>, scalar_prefetch = 0 : i64, scratch_operands = 1 : i64, tpu.core_type = #tpu.core_type<tc>, window_params = [{transform_indices = @transform_0, window_bounds = array<i64: 2, 16, 128>}, {pipeline_mode = #tpu.pipeline_mode<synchronous>, transform_indices = @transform_1, window_bounds = array<i64: 384, 128>}, {pipeline_mode = #tpu.pipeline_mode<synchronous>, transform_indices = @transform_2, window_bounds = array<i64: 1, 128>}, {pipeline_mode = #tpu.pipeline_mode<synchronous>, transform_indices = @transform_3, window_bounds = array<i64: 384, 128>}, {pipeline_mode = #tpu.pipeline_mode<synchronous>, transform_indices = @transform_4, window_bounds = array<i64: 1, 128>}, {pipeline_mode = #tpu.pipeline_mode<synchronous>, transform_indices = @transform_5, window_bounds = array<i64: 128, 128>}, {pipeline_mode = #tpu.pipeline_mode<synchronous>, transform_indices = @transform_6, window_bounds = array<i64: 1, 128>}, {pipeline_mode = #tpu.pipeline_mode<synchronous>, transform_indices = @transform_7, window_bounds = array<i64: 384, 128>}, {pipeline_mode = #tpu.pipeline_mode<synchronous>, transform_indices = @transform_8, window_bounds = array<i64: 1, 128>}, {pipeline_mode = #tpu.pipeline_mode<synchronous>, transform_indices = @transform_9, window_bounds = array<i64: 384, 128>}, {pipeline_mode = #tpu.pipeline_mode<synchronous>, transform_indices = @transform_10, window_bounds = array<i64: 1, 128>}, {pipeline_mode = #tpu.pipeline_mode<synchronous>, transform_indices = @transform_11, window_bounds = array<i64: 128, 128>}, {pipeline_mode = #tpu.pipeline_mode<synchronous>, transform_indices = @transform_12, window_bounds = array<i64: 1, 128>}, {transform_indices = @transform_13, window_bounds = array<i64: 2, 16, 128>}]} {
    %cst = arith.constant 0.000000e+00 : bf16
    %0 = vector.broadcast %cst : bf16 to vector<2x16x128xbf16>
    %c0 = arith.constant 0 : index
    %c0_0 = arith.constant 0 : index
    %c0_1 = arith.constant 0 : index
    %1 = vector.load %arg15[%c0, %c0_0, %c0_1] : memref<2x32x128xbf16, #tpu.memory_space<vmem>>, vector<2x16x128xbf16>
    tpu.vector_store %arg15[%c0, %c0_0, %c0_1], %0 {strides = array<i32>} : memref<2x32x128xbf16, #tpu.memory_space<vmem>>, vector<2x16x128xbf16>,
    %c0_2 = arith.constant 0 : index
    %c0_3 = arith.constant 0 : index
    %c0_4 = arith.constant 0 : index
    %2 = vector.load %arg1[%c0_2, %c0_3, %c0_4] : memref<2x16x128xf32, #tpu.memory_space<vmem>>, vector<2x16x128xf32>
    %3 = vector.shape_cast %2 : vector<2x16x128xf32> to vector<32x128xf32>
    %4 = arith.truncf %3 : vector<32x128xf32> to vector<32x128xbf16>
    %c0_5 = arith.constant 0 : index
    %c0_6 = arith.constant 0 : index
    %5 = vector.load %arg6[%c0_5, %c0_6] : memref<128x128xbf16, #tpu.memory_space<vmem>>, vector<128x128xbf16>
    %cst_7 = arith.constant dense<0.000000e+00> : vector<32x128xf32>
    %6 = tpu.matmul %4, %5, %cst_7 {dimension_numbers = #tpu.dot_dimension_numbers<[1], [0], [0], [1], [0, 0, 1, 1], [], []>} : vector<32x128xbf16>, vector<128x128xbf16>, vector<32x128xf32> -> vector<32x128xf32>
    %c0_8 = arith.constant 0 : index
    %c0_9 = arith.constant 0 : index
    %7 = vector.load %arg7[%c0_8, %c0_9] : memref<1x128xf32, #tpu.memory_space<vmem>>, vector<1x128xf32>
    %8 = vector.broadcast %7 : vector<1x128xf32> to vector<32x128xf32>
    %9 = arith.addf %6, %8 : vector<32x128xf32>
    %10 = vector.shape_cast %4 : vector<32x128xbf16> to vector<2x16x128xbf16>
    %c0_10 = arith.constant 0 : index
    %c16 = arith.constant 16 : index
    %c0_11 = arith.constant 0 : index
    %11 = vector.load %arg15[%c0_10, %c16, %c0_11] : memref<2x32x128xbf16, #tpu.memory_space<vmem>>, vector<2x16x128xbf16>
    tpu.vector_store %arg15[%c0_10, %c16, %c0_11], %10 {strides = array<i32>} : memref<2x32x128xbf16, #tpu.memory_space<vmem>>, vector<2x16x128xbf16>,
    %c0_12 = arith.constant 0 : index
    %c14 = arith.constant 14 : index
    %c0_13 = arith.constant 0 : index
    %12 = vector.load %arg15[%c0_12, %c14, %c0_13] : memref<2x32x128xbf16, #tpu.memory_space<vmem>>, vector<2x16x128xbf16>
    %c0_14 = arith.constant 0 : index
    %c15 = arith.constant 15 : index
    %c0_15 = arith.constant 0 : index
    %13 = vector.load %arg15[%c0_14, %c15, %c0_15] : memref<2x32x128xbf16, #tpu.memory_space<vmem>>, vector<2x16x128xbf16>
    %c0_16 = arith.constant 0 : index
    %c16_17 = arith.constant 16 : index
    %c0_18 = arith.constant 0 : index
    %14 = vector.load %arg15[%c0_16, %c16_17, %c0_18] : memref<2x32x128xbf16, #tpu.memory_space<vmem>>, vector<2x16x128xbf16>
    %15 = tpu.concatenate %12, %13, %14 in 2 : vector<2x16x128xbf16>, vector<2x16x128xbf16>, vector<2x16x128xbf16> -> vector<2x16x384xbf16>
    %16 = vector.shape_cast %15 : vector<2x16x384xbf16> to vector<32x384xbf16>
    %c0_19 = arith.constant 0 : index
    %c0_20 = arith.constant 0 : index
    %17 = vector.load %arg2[%c0_19, %c0_20] : memref<384x128xbf16, #tpu.memory_space<vmem>>, vector<384x128xbf16>
    %cst_21 = arith.constant dense<0.000000e+00> : vector<32x128xf32>
    %18 = tpu.matmul %16, %17, %cst_21 {dimension_numbers = #tpu.dot_dimension_numbers<[1], [0], [0], [1], [0, 0, 1, 1], [], []>} : vector<32x384xbf16>, vector<384x128xbf16>, vector<32x128xf32> -> vector<32x128xf32>
    %c0_22 = arith.constant 0 : index
    %c0_23 = arith.constant 0 : index
    %19 = vector.load %arg3[%c0_22, %c0_23] : memref<1x128xf32, #tpu.memory_space<vmem>>, vector<1x128xf32>
    %20 = vector.broadcast %19 : vector<1x128xf32> to vector<32x128xf32>
    %21 = arith.addf %18, %20 : vector<32x128xf32>
    %cst_24 = arith.constant 0.000000e+00 : f32
    %22 = vector.broadcast %cst_24 : f32 to vector<32x128xf32>
    %23 = arith.maximumf %21, %22 : vector<32x128xf32>
    %24 = arith.truncf %23 : vector<32x128xf32> to vector<32x128xbf16>
    %25 = vector.shape_cast %24 : vector<32x128xbf16> to vector<2x16x128xbf16>
    %c0_25 = arith.constant 0 : index
    %c16_26 = arith.constant 16 : index
    %c0_27 = arith.constant 0 : index
    %26 = vector.load %arg15[%c0_25, %c16_26, %c0_27] : memref<2x32x128xbf16, #tpu.memory_space<vmem>>, vector<2x16x128xbf16>
    tpu.vector_store %arg15[%c0_25, %c16_26, %c0_27], %25 {strides = array<i32>} : memref<2x32x128xbf16, #tpu.memory_space<vmem>>, vector<2x16x128xbf16>,
    %c0_28 = arith.constant 0 : index
    %c14_29 = arith.constant 14 : index
    %c0_30 = arith.constant 0 : index
    %27 = vector.load %arg15[%c0_28, %c14_29, %c0_30] : memref<2x32x128xbf16, #tpu.memory_space<vmem>>, vector<2x16x128xbf16>
    %c0_31 = arith.constant 0 : index
    %c15_32 = arith.constant 15 : index
    %c0_33 = arith.constant 0 : index
    %28 = vector.load %arg15[%c0_31, %c15_32, %c0_33] : memref<2x32x128xbf16, #tpu.memory_space<vmem>>, vector<2x16x128xbf16>
    %c0_34 = arith.constant 0 : index
    %c16_35 = arith.constant 16 : index
    %c0_36 = arith.constant 0 : index
    %29 = vector.load %arg15[%c0_34, %c16_35, %c0_36] : memref<2x32x128xbf16, #tpu.memory_space<vmem>>, vector<2x16x128xbf16>
    %30 = tpu.concatenate %27, %28, %29 in 2 : vector<2x16x128xbf16>, vector<2x16x128xbf16>, vector<2x16x128xbf16> -> vector<2x16x384xbf16>
    %31 = vector.shape_cast %30 : vector<2x16x384xbf16> to vector<32x384xbf16>
    %c0_37 = arith.constant 0 : index
    %c0_38 = arith.constant 0 : index
    %32 = vector.load %arg4[%c0_37, %c0_38] : memref<384x128xbf16, #tpu.memory_space<vmem>>, vector<384x128xbf16>
    %cst_39 = arith.constant dense<0.000000e+00> : vector<32x128xf32>
    %33 = tpu.matmul %31, %32, %cst_39 {dimension_numbers = #tpu.dot_dimension_numbers<[1], [0], [0], [1], [0, 0, 1, 1], [], []>} : vector<32x384xbf16>, vector<384x128xbf16>, vector<32x128xf32> -> vector<32x128xf32>
    %c0_40 = arith.constant 0 : index
    %c0_41 = arith.constant 0 : index
    %34 = vector.load %arg5[%c0_40, %c0_41] : memref<1x128xf32, #tpu.memory_space<vmem>>, vector<1x128xf32>
    %35 = vector.broadcast %34 : vector<1x128xf32> to vector<32x128xf32>
    %36 = arith.addf %33, %35 : vector<32x128xf32>
    %cst_42 = arith.constant 0.000000e+00 : f32
    %37 = vector.broadcast %cst_42 : f32 to vector<32x128xf32>
    %38 = arith.maximumf %36, %37 : vector<32x128xf32>
    %39 = arith.addf %38, %9 : vector<32x128xf32>
    %cst_43 = arith.constant 0.000000e+00 : f32
    %40 = vector.broadcast %cst_43 : f32 to vector<32x128xf32>
    %41 = arith.maximumf %39, %40 : vector<32x128xf32>
    %42 = arith.truncf %41 : vector<32x128xf32> to vector<32x128xbf16>
    %43 = vector.shape_cast %42 : vector<32x128xbf16> to vector<2x16x128xbf16>
    %c0_44 = arith.constant 0 : index
    %c16_45 = arith.constant 16 : index
    %c0_46 = arith.constant 0 : index
    %44 = vector.load %arg15[%c0_44, %c16_45, %c0_46] : memref<2x32x128xbf16, #tpu.memory_space<vmem>>, vector<2x16x128xbf16>
    tpu.vector_store %arg15[%c0_44, %c16_45, %c0_46], %43 {strides = array<i32>} : memref<2x32x128xbf16, #tpu.memory_space<vmem>>, vector<2x16x128xbf16>,
    %c0_47 = arith.constant 0 : index
    %c12 = arith.constant 12 : index
    %c0_48 = arith.constant 0 : index
    %45 = vector.load %arg15[%c0_47, %c12, %c0_48] : memref<2x32x128xbf16, #tpu.memory_space<vmem>>, vector<2x16x128xbf16>
    %c0_49 = arith.constant 0 : index
    %c14_50 = arith.constant 14 : index
    %c0_51 = arith.constant 0 : index
    %46 = vector.load %arg15[%c0_49, %c14_50, %c0_51] : memref<2x32x128xbf16, #tpu.memory_space<vmem>>, vector<2x16x128xbf16>
    %c0_52 = arith.constant 0 : index
    %c16_53 = arith.constant 16 : index
    %c0_54 = arith.constant 0 : index
    %47 = vector.load %arg15[%c0_52, %c16_53, %c0_54] : memref<2x32x128xbf16, #tpu.memory_space<vmem>>, vector<2x16x128xbf16>
    %48 = tpu.concatenate %45, %46, %47 in 2 : vector<2x16x128xbf16>, vector<2x16x128xbf16>, vector<2x16x128xbf16> -> vector<2x16x384xbf16>
    %49 = vector.shape_cast %48 : vector<2x16x384xbf16> to vector<32x384xbf16>
    %c0_55 = arith.constant 0 : index
    %c0_56 = arith.constant 0 : index
    %50 = vector.load %arg8[%c0_55, %c0_56] : memref<384x128xbf16, #tpu.memory_space<vmem>>, vector<384x128xbf16>
    %cst_57 = arith.constant dense<0.000000e+00> : vector<32x128xf32>
    %51 = tpu.matmul %49, %50, %cst_57 {dimension_numbers = #tpu.dot_dimension_numbers<[1], [0], [0], [1], [0, 0, 1, 1], [], []>} : vector<32x384xbf16>, vector<384x128xbf16>, vector<32x128xf32> -> vector<32x128xf32>
    %c0_58 = arith.constant 0 : index
    %c0_59 = arith.constant 0 : index
    %52 = vector.load %arg9[%c0_58, %c0_59] : memref<1x128xf32, #tpu.memory_space<vmem>>, vector<1x128xf32>
    %53 = vector.broadcast %52 : vector<1x128xf32> to vector<32x128xf32>
    %54 = arith.addf %51, %53 : vector<32x128xf32>
    %cst_60 = arith.constant 0.000000e+00 : f32
    %55 = vector.broadcast %cst_60 : f32 to vector<32x128xf32>
    %56 = arith.maximumf %54, %55 : vector<32x128xf32>
    %57 = arith.truncf %56 : vector<32x128xf32> to vector<32x128xbf16>
    %58 = vector.shape_cast %57 : vector<32x128xbf16> to vector<2x16x128xbf16>
    %c0_61 = arith.constant 0 : index
    %c16_62 = arith.constant 16 : index
    %c0_63 = arith.constant 0 : index
    %59 = vector.load %arg15[%c0_61, %c16_62, %c0_63] : memref<2x32x128xbf16, #tpu.memory_space<vmem>>, vector<2x16x128xbf16>
    tpu.vector_store %arg15[%c0_61, %c16_62, %c0_63], %58 {strides = array<i32>} : memref<2x32x128xbf16, #tpu.memory_space<vmem>>, vector<2x16x128xbf16>,
    %c0_64 = arith.constant 0 : index
    %c12_65 = arith.constant 12 : index
    %c0_66 = arith.constant 0 : index
    %60 = vector.load %arg15[%c0_64, %c12_65, %c0_66] : memref<2x32x128xbf16, #tpu.memory_space<vmem>>, vector<2x16x128xbf16>
    %c0_67 = arith.constant 0 : index
    %c14_68 = arith.constant 14 : index
    %c0_69 = arith.constant 0 : index
    %61 = vector.load %arg15[%c0_67, %c14_68, %c0_69] : memref<2x32x128xbf16, #tpu.memory_space<vmem>>, vector<2x16x128xbf16>
    %c0_70 = arith.constant 0 : index
    %c16_71 = arith.constant 16 : index
    %c0_72 = arith.constant 0 : index
    %62 = vector.load %arg15[%c0_70, %c16_71, %c0_72] : memref<2x32x128xbf16, #tpu.memory_space<vmem>>, vector<2x16x128xbf16>
    %63 = tpu.concatenate %60, %61, %62 in 2 : vector<2x16x128xbf16>, vector<2x16x128xbf16>, vector<2x16x128xbf16> -> vector<2x16x384xbf16>
    %64 = vector.shape_cast %63 : vector<2x16x384xbf16> to vector<32x384xbf16>
    %c0_73 = arith.constant 0 : index
    %c0_74 = arith.constant 0 : index
    %65 = vector.load %arg10[%c0_73, %c0_74] : memref<384x128xbf16, #tpu.memory_space<vmem>>, vector<384x128xbf16>
    %cst_75 = arith.constant dense<0.000000e+00> : vector<32x128xf32>
    %66 = tpu.matmul %64, %65, %cst_75 {dimension_numbers = #tpu.dot_dimension_numbers<[1], [0], [0], [1], [0, 0, 1, 1], [], []>} : vector<32x384xbf16>, vector<384x128xbf16>, vector<32x128xf32> -> vector<32x128xf32>
    %c0_76 = arith.constant 0 : index
    %c0_77 = arith.constant 0 : index
    %67 = vector.load %arg11[%c0_76, %c0_77] : memref<1x128xf32, #tpu.memory_space<vmem>>, vector<1x128xf32>
    %68 = vector.broadcast %67 : vector<1x128xf32> to vector<32x128xf32>
    %69 = arith.addf %66, %68 : vector<32x128xf32>
    %cst_78 = arith.constant 0.000000e+00 : f32
    %70 = vector.broadcast %cst_78 : f32 to vector<32x128xf32>
    %71 = arith.maximumf %69, %70 : vector<32x128xf32>
    %72 = arith.addf %71, %41 : vector<32x128xf32>
    %cst_79 = arith.constant 0.000000e+00 : f32
    %73 = vector.broadcast %cst_79 : f32 to vector<32x128xf32>
    %74 = arith.maximumf %72, %73 : vector<32x128xf32>
    %75 = arith.truncf %74 : vector<32x128xf32> to vector<32x128xbf16>
    %c0_80 = arith.constant 0 : index
    %c0_81 = arith.constant 0 : index
    %76 = vector.load %arg12[%c0_80, %c0_81] : memref<128x128xbf16, #tpu.memory_space<vmem>>, vector<128x128xbf16>
    %cst_82 = arith.constant dense<0.000000e+00> : vector<32x128xf32>
    %77 = tpu.matmul %75, %76, %cst_82 {dimension_numbers = #tpu.dot_dimension_numbers<[1], [0], [0], [1], [0, 0, 1, 1], [], []>} : vector<32x128xbf16>, vector<128x128xbf16>, vector<32x128xf32> -> vector<32x128xf32>
    %c0_83 = arith.constant 0 : index
    %c0_84 = arith.constant 0 : index
    %78 = vector.load %arg13[%c0_83, %c0_84] : memref<1x128xf32, #tpu.memory_space<vmem>>, vector<1x128xf32>
    %79 = vector.broadcast %78 : vector<1x128xf32> to vector<32x128xf32>
    %80 = arith.addf %77, %79 : vector<32x128xf32>
    %81 = arith.negf %80 : vector<32x128xf32>
    %82 = math.exp %81 : vector<32x128xf32>
    %cst_85 = arith.constant 1.000000e+00 : f32
    %83 = vector.broadcast %cst_85 : f32 to vector<32x128xf32>
    %84 = arith.addf %83, %82 : vector<32x128xf32>
    %85 = arith.divf %83, %84 : vector<32x128xf32>
    %86 = vector.shape_cast %85 : vector<32x128xf32> to vector<2x16x128xf32>
    %c0_86 = arith.constant 0 : index
    %c0_87 = arith.constant 0 : index
    %c0_88 = arith.constant 0 : index
    %87 = vector.load %arg14[%c0_86, %c0_87, %c0_88] : memref<2x16x128xf32, #tpu.memory_space<vmem>>, vector<2x16x128xf32>
    tpu.vector_store %arg14[%c0_86, %c0_87, %c0_88], %86 {strides = array<i32>} : memref<2x16x128xf32, #tpu.memory_space<vmem>>, vector<2x16x128xf32>,
    return
  }
  func.func @transform_0(%arg0: i32) -> (i32, i32, i32) {
    %c0_i32 = arith.constant 0 : i32
    %c0_i32_0 = arith.constant 0 : i32
    %c0_i32_1 = arith.constant 0 : i32
    return %arg0, %c0_i32, %c0_i32_0 : i32, i32, i32
  }
  func.func @transform_1(%arg0: i32) -> (i32, i32) {
    %c0_i32 = arith.constant 0 : i32
    %c0_i32_0 = arith.constant 0 : i32
    %c0_i32_1 = arith.constant 0 : i32
    return %c0_i32, %c0_i32_0 : i32, i32
  }
  func.func @transform_2(%arg0: i32) -> (i32, i32) {
    %c0_i32 = arith.constant 0 : i32
    %c0_i32_0 = arith.constant 0 : i32
    %c0_i32_1 = arith.constant 0 : i32
    return %c0_i32, %c0_i32_0 : i32, i32
  }
  func.func @transform_3(%arg0: i32) -> (i32, i32) {
    %c0_i32 = arith.constant 0 : i32
    %c0_i32_0 = arith.constant 0 : i32
    %c0_i32_1 = arith.constant 0 : i32
    return %c0_i32, %c0_i32_0 : i32, i32
  }
  func.func @transform_4(%arg0: i32) -> (i32, i32) {
    %c0_i32 = arith.constant 0 : i32
    %c0_i32_0 = arith.constant 0 : i32
    %c0_i32_1 = arith.constant 0 : i32
    return %c0_i32, %c0_i32_0 : i32, i32
  }
  func.func @transform_5(%arg0: i32) -> (i32, i32) {
    %c0_i32 = arith.constant 0 : i32
    %c0_i32_0 = arith.constant 0 : i32
    %c0_i32_1 = arith.constant 0 : i32
    return %c0_i32, %c0_i32_0 : i32, i32
  }
  func.func @transform_6(%arg0: i32) -> (i32, i32) {
    %c0_i32 = arith.constant 0 : i32
    %c0_i32_0 = arith.constant 0 : i32
    %c0_i32_1 = arith.constant 0 : i32
    return %c0_i32, %c0_i32_0 : i32, i32
  }
  func.func @transform_7(%arg0: i32) -> (i32, i32) {
    %c0_i32 = arith.constant 0 : i32
    %c0_i32_0 = arith.constant 0 : i32
    %c0_i32_1 = arith.constant 0 : i32
    return %c0_i32, %c0_i32_0 : i32, i32
  }
  func.func @transform_8(%arg0: i32) -> (i32, i32) {
    %c0_i32 = arith.constant 0 : i32
    %c0_i32_0 = arith.constant 0 : i32
    %c0_i32_1 = arith.constant 0 : i32
    return %c0_i32, %c0_i32_0 : i32, i32
  }
  func.func @transform_9(%arg0: i32) -> (i32, i32) {
    %c0_i32 = arith.constant 0 : i32
    %c0_i32_0 = arith.constant 0 : i32
    %c0_i32_1 = arith.constant 0 : i32
    return %c0_i32, %c0_i32_0 : i32, i32
  }
  func.func @transform_10(%arg0: i32) -> (i32, i32) {
    %c0_i32 = arith.constant 0 : i32
    %c0_i32_0 = arith.constant 0 : i32
    %c0_i32_1 = arith.constant 0 : i32
    return %c0_i32, %c0_i32_0 : i32, i32
  }
  func.func @transform_11(%arg0: i32) -> (i32, i32) {
    %c0_i32 = arith.constant 0 : i32
    %c0_i32_0 = arith.constant 0 : i32
    %c0_i32_1 = arith.constant 0 : i32
    return %c0_i32, %c0_i32_0 : i32, i32
  }
  func.func @transform_12(%arg0: i32) -> (i32, i32) {
    %c0_i32 = arith.constant 0 : i32
    %c0_i32_0 = arith.constant 0 : i32
    %c0_i32_1 = arith.constant 0 : i32
    return %c0_i32, %c0_i32_0 : i32, i32
  }
  func.func @transform_13(%arg0: i32) -> (i32, i32, i32) {
    %c0_i32 = arith.constant 0 : i32
    %c0_i32_0 = arith.constant 0 : i32
    %c0_i32_1 = arith.constant 0 : i32
    return %arg0, %c0_i32, %c0_i32_0 : i32, i32, i32
  }
}

</mosaic_0001>

<llo_original>
// kernel: tpu_custom_call.1
$region0: #{tpu_custom_call.1}
  #allocation0 [shape = 'u32[]', space=smem, size = 0x4, offset = 0x4, fixed_abs, tag = 'smem constant byte address 0x4 - core index']
  #allocation1 [shape = 'u32[144,128]{1,0:T(1,128)}', space=vmem, size = 0x12000, scoped, tag = 'internal scratch']
  #allocation2 [shape = 'bf16[2,32,128]{2,1,0:T(16,128)(2,1)}', space=vmem, size = 0x4000, scoped, tag = 'scratch operand']
  %s0 = inlined_call_operand.hbm [shape: f32[2,16,128], index: 0, kind: input, shape index: {}]
  %s1 = inlined_call_operand.hbm [shape: bf16[384,128], index: 1, kind: input, shape index: {}]
  %s2 = inlined_call_operand.vmem [shape: f32[1,128], index: 2, kind: input, shape index: {}]
  %s3 = inlined_call_operand.hbm [shape: bf16[384,128], index: 3, kind: input, shape index: {}]
  %s4 = inlined_call_operand.vmem [shape: f32[1,128], index: 4, kind: input, shape index: {}]
  %s5 = inlined_call_operand.hbm [shape: bf16[128,128], index: 5, kind: input, shape index: {}]
  %s6 = inlined_call_operand.vmem [shape: f32[1,128], index: 6, kind: input, shape index: {}]
  %s7 = inlined_call_operand.hbm [shape: bf16[384,128], index: 7, kind: input, shape index: {}]
  %s8 = inlined_call_operand.vmem [shape: f32[1,128], index: 8, kind: input, shape index: {}]
  %s9 = inlined_call_operand.hbm [shape: bf16[384,128], index: 9, kind: input, shape index: {}]
  %s10 = inlined_call_operand.vmem [shape: f32[1,128], index: 10, kind: input, shape index: {}]
  %s11 = inlined_call_operand.hbm [shape: bf16[128,128], index: 11, kind: input, shape index: {}]
  %s12 = inlined_call_operand.vmem [shape: f32[1,128], index: 12, kind: input, shape index: {}]
  %s13 = inlined_call_operand.hbm [shape: f32[2,16,128], index: 13, kind: output, shape index: {}]
  %s14 = sld [smem:[#allocation0]]
  $region90: #{tpu_custom_call.1} parent=0
    _
  %s16 = ssub.s32 1, %s14
  %s17 = scalar_select 0, %s16, %s14
  $region1: #{tpu_custom_call.1} parent=0
    #allocation3 [shape = 'u8[16384]{0}', space=vmem, size = 0x4000, scoped, tag = 'input window, operand 0, single buffered']
    #allocation4 [shape = 's32[1]{0}', space=sflag, size = 0x4, scoped, tag = 'scoped memory for tpu_custom_call.1']
    #allocation5 [shape = 's32[1]{0}', space=sflag, size = 0x4, scoped, tag = 'scoped memory for tpu_custom_call.1']
    #allocation6 [shape = 'u8[98304]{0}', space=vmem, size = 0x18000, scoped, tag = 'input window, operand 1, single buffered']
    #allocation7 [shape = 's32[1]{0}', space=sflag, size = 0x4, scoped, tag = 'scoped memory for tpu_custom_call.1']
    #allocation8 [shape = 'u8[98304]{0}', space=vmem, size = 0x18000, scoped, tag = 'input window, operand 3, single buffered']
    #allocation9 [shape = 'u8[32768]{0}', space=vmem, size = 0x8000, scoped, tag = 'input window, operand 5, single buffered']
    #allocation10 [shape = 's32[1]{0}', space=sflag, size = 0x4, scoped, tag = 'scoped memory for tpu_custom_call.1']
    #allocation11 [shape = 'u8[98304]{0}', space=vmem, size = 0x18000, scoped, tag = 'input window, operand 7, single buffered']
    #allocation12 [shape = 'u8[98304]{0}', space=vmem, size = 0x18000, scoped, tag = 'input window, operand 9, single buffered']
    #allocation13 [shape = 's32[1]{0}', space=sflag, size = 0x4, scoped, tag = 'scoped memory for tpu_custom_call.1']
    #allocation14 [shape = 'u8[32768]{0}', space=vmem, size = 0x8000, scoped, tag = 'input window, operand 11, single buffered']
    #allocation15 [shape = 'u8[16384]{0}', space=vmem, size = 0x4000, scoped, tag = 'output window, operand 0, single buffered']
    %18 = vsyncpa [#allocation4], 0
    %19 = vsyncpa [#allocation7], 0
    %20 = vsyncpa [#allocation10], 0
    %21 = vsyncpa [#allocation13], 0
    %22 = vsyncpa [#allocation5], 0
    // Predicated region
    $region2: #{tpu_custom_call.1} parent=1 // pred_check
      _
    $region3: #{tpu_custom_call.1} parent=1 // pred_check_branch
      %24 = sbr.rel (0) target = $region5
    $region4: #{tpu_custom_call.1} parent=1 // pred_region
      %s26 = ssub.s32 512, 512
      %27 = vsyncadd [#allocation4], %s26
      %s28 = sshll.u32 [#allocation3], 4
      %s29 = int_to_ptr.vmem [resolvable:$true] %s28
      %34 = dma.hbm_to_vmem [thread:$0]  %s0, 512, %s29, [#allocation4], 128, 128, 8
    $region5: #{tpu_custom_call.1} parent=1 // pred_fallthru
      _
    // Predicated region
    $region6: #{tpu_custom_call.1} parent=1 // pred_check
      _
    $region7: #{tpu_custom_call.1} parent=1 // pred_check_branch
      %36 = sbr.rel (0) target = $region9
    $region8: #{tpu_custom_call.1} parent=1 // pred_region
      %s38 = ssub.s32 3072, 3072
      %39 = vsyncadd [#allocation7], %s38
      %s40 = sshll.u32 [#allocation6], 4
      %s41 = int_to_ptr.vmem [resolvable:$true] %s40
      %46 = dma.hbm_to_vmem [thread:$0]  %s1, 3072, %s41, [#allocation7], 64, 64, 4
    $region9: #{tpu_custom_call.1} parent=1 // pred_fallthru
      _
    // Predicated region
    $region10: #{tpu_custom_call.1} parent=1 // pred_check
      _
    $region11: #{tpu_custom_call.1} parent=1 // pred_check_branch
      %48 = sbr.rel (0) target = $region13
    $region12: #{tpu_custom_call.1} parent=1 // pred_region
      _
    $region13: #{tpu_custom_call.1} parent=1 // pred_fallthru
      _
    // Predicated region
    $region14: #{tpu_custom_call.1} parent=1 // pred_check
      _
    $region15: #{tpu_custom_call.1} parent=1 // pred_check_branch
      %50 = sbr.rel (0) target = $region17
    $region16: #{tpu_custom_call.1} parent=1 // pred_region
      %s52 = ssub.s32 3072, 3072
      %53 = vsyncadd [#allocation7], %s52
      %s54 = sshll.u32 [#allocation8], 4
      %s55 = int_to_ptr.vmem [resolvable:$true] %s54
      %60 = dma.hbm_to_vmem [thread:$0]  %s3, 3072, %s55, [#allocation7], 64, 64, 4
    $region17: #{tpu_custom_call.1} parent=1 // pred_fallthru
      _
    // Predicated region
    $region18: #{tpu_custom_call.1} parent=1 // pred_check
      _
    $region19: #{tpu_custom_call.1} parent=1 // pred_check_branch
      %62 = sbr.rel (0) target = $region21
    $region20: #{tpu_custom_call.1} parent=1 // pred_region
      _
    $region21: #{tpu_custom_call.1} parent=1 // pred_fallthru
      _
    // Predicated region
    $region22: #{tpu_custom_call.1} parent=1 // pred_check
      _
    $region23: #{tpu_custom_call.1} parent=1 // pred_check_branch
      %64 = sbr.rel (0) target = $region25
    $region24: #{tpu_custom_call.1} parent=1 // pred_region
      %s66 = ssub.s32 1024, 1024
      %67 = vsyncadd [#allocation10], %s66
      %s68 = sshll.u32 [#allocation9], 4
      %s69 = int_to_ptr.vmem [resolvable:$true] %s68
      %74 = dma.hbm_to_vmem [thread:$0]  %s5, 1024, %s69, [#allocation10], 64, 64, 4
    $region25: #{tpu_custom_call.1} parent=1 // pred_fallthru
      _
    // Predicated region
    $region26: #{tpu_custom_call.1} parent=1 // pred_check
      _
    $region27: #{tpu_custom_call.1} parent=1 // pred_check_branch
      %76 = sbr.rel (0) target = $region29
    $region28: #{tpu_custom_call.1} parent=1 // pred_region
      _
    $region29: #{tpu_custom_call.1} parent=1 // pred_fallthru
      _
    // Predicated region
    $region30: #{tpu_custom_call.1} parent=1 // pred_check
      _
    $region31: #{tpu_custom_call.1} parent=1 // pred_check_branch
      %78 = sbr.rel (0) target = $region33
    $region32: #{tpu_custom_call.1} parent=1 // pred_region
      %s80 = ssub.s32 3072, 3072
      %81 = vsyncadd [#allocation10], %s80
      %s82 = sshll.u32 [#allocation11], 4
      %s83 = int_to_ptr.vmem [resolvable:$true] %s82
      %88 = dma.hbm_to_vmem [thread:$0]  %s7, 3072, %s83, [#allocation10], 64, 64, 4
    $region33: #{tpu_custom_call.1} parent=1 // pred_fallthru
      _
    // Predicated region
    $region34: #{tpu_custom_call.1} parent=1 // pred_check
      _
    $region35: #{tpu_custom_call.1} parent=1 // pred_check_branch
      %90 = sbr.rel (0) target = $region37
    $region36: #{tpu_custom_call.1} parent=1 // pred_region
      _
    $region37: #{tpu_custom_call.1} parent=1 // pred_fallthru
      _
    // Predicated region
    $region38: #{tpu_custom_call.1} parent=1 // pred_check
      _
    $region39: #{tpu_custom_call.1} parent=1 // pred_check_branch
      %92 = sbr.rel (0) target = $region41
    $region40: #{tpu_custom_call.1} parent=1 // pred_region
      %s94 = ssub.s32 3072, 3072
      %95 = vsyncadd [#allocation13], %s94
      %s96 = sshll.u32 [#allocation12], 4
      %s97 = int_to_ptr.vmem [resolvable:$true] %s96
      %102 = dma.hbm_to_vmem [thread:$0]  %s9, 3072, %s97, [#allocation13], 64, 64, 4
    $region41: #{tpu_custom_call.1} parent=1 // pred_fallthru
      _
    // Predicated region
    $region42: #{tpu_custom_call.1} parent=1 // pred_check
      _
    $region43: #{tpu_custom_call.1} parent=1 // pred_check_branch
      %104 = sbr.rel (0) target = $region45
    $region44: #{tpu_custom_call.1} parent=1 // pred_region
      _
    $region45: #{tpu_custom_call.1} parent=1 // pred_fallthru
      _
    // Predicated region
    $region46: #{tpu_custom_call.1} parent=1 // pred_check
      _
    $region47: #{tpu_custom_call.1} parent=1 // pred_check_branch
      %106 = sbr.rel (0) target = $region49
    $region48: #{tpu_custom_call.1} parent=1 // pred_region
      %s108 = ssub.s32 1024, 1024
      %109 = vsyncadd [#allocation13], %s108
      %s110 = sshll.u32 [#allocation14], 4
      %s111 = int_to_ptr.vmem [resolvable:$true] %s110
      %116 = dma.hbm_to_vmem [thread:$0]  %s11, 1024, %s111, [#allocation13], 64, 64, 4
    $region49: #{tpu_custom_call.1} parent=1 // pred_fallthru
      _
    // Predicated region
    $region50: #{tpu_custom_call.1} parent=1 // pred_check
      _
    $region51: #{tpu_custom_call.1} parent=1 // pred_check_branch
      %118 = sbr.rel (0) target = $region53
    $region52: #{tpu_custom_call.1} parent=1 // pred_region
      _
    $region53: #{tpu_custom_call.1} parent=1 // pred_fallthru
      _
    // Predicated region
    $region54: #{tpu_custom_call.1} parent=1 // pred_check
      _
    $region55: #{tpu_custom_call.1} parent=1 // pred_check_branch
      %120 = sbr.rel (0) target = $region57
    $region56: #{tpu_custom_call.1} parent=1 // pred_region
      %121 = dma.done [#allocation4], 512
    $region57: #{tpu_custom_call.1} parent=1 // pred_fallthru
      _
    // Predicated region
    $region58: #{tpu_custom_call.1} parent=1 // pred_check
      _
    $region59: #{tpu_custom_call.1} parent=1 // pred_check_branch
      %123 = sbr.rel (0) target = $region61
    $region60: #{tpu_custom_call.1} parent=1 // pred_region
      %124 = dma.done [#allocation7], 3072
    $region61: #{tpu_custom_call.1} parent=1 // pred_fallthru
      _
    // Predicated region
    $region62: #{tpu_custom_call.1} parent=1 // pred_check
      _
    $region63: #{tpu_custom_call.1} parent=1 // pred_check_branch
      %126 = sbr.rel (0) target = $region65
    $region64: #{tpu_custom_call.1} parent=1 // pred_region
      %127 = dma.done [#allocation7], 3072
    $region65: #{tpu_custom_call.1} parent=1 // pred_fallthru
      _
    // Predicated region
    $region66: #{tpu_custom_call.1} parent=1 // pred_check
      _
    $region67: #{tpu_custom_call.1} parent=1 // pred_check_branch
      %129 = sbr.rel (0) target = $region69
    $region68: #{tpu_custom_call.1} parent=1 // pred_region
      %130 = dma.done [#allocation10], 1024
    $region69: #{tpu_custom_call.1} parent=1 // pred_fallthru
      _
    // Predicated region
    $region70: #{tpu_custom_call.1} parent=1 // pred_check
      _
    $region71: #{tpu_custom_call.1} parent=1 // pred_check_branch
      %132 = sbr.rel (0) target = $region73
    $region72: #{tpu_custom_call.1} parent=1 // pred_region
      %133 = dma.done [#allocation10], 3072
    $region73: #{tpu_custom_call.1} parent=1 // pred_fallthru
      _
    // Predicated region
    $region74: #{tpu_custom_call.1} parent=1 // pred_check
      _
    $region75: #{tpu_custom_call.1} parent=1 // pred_check_branch
      %135 = sbr.rel (0) target = $region77
    $region76: #{tpu_custom_call.1} parent=1 // pred_region
      %136 = dma.done [#allocation13], 3072
    $region77: #{tpu_custom_call.1} parent=1 // pred_fallthru
      _
    // Predicated region
    $region78: #{tpu_custom_call.1} parent=1 // pred_check
      _
    $region79: #{tpu_custom_call.1} parent=1 // pred_check_branch
      %138 = sbr.rel (0) target = $region81
    $region80: #{tpu_custom_call.1} parent=1 // pred_region
      %139 = dma.done [#allocation13], 1024
    $region81: #{tpu_custom_call.1} parent=1 // pred_fallthru
      _
    %141 = vst [vmem:[#allocation2] sm:$0xff] 0
    %142 = vst [vmem:[#allocation2 + $0x10] sm:$0xff] 0
    %v143 = vld [vmem:[#allocation3] sm:$0xff]
    %v144 = vld [vmem:[#allocation3 + $0x8] sm:$0xff]
    %v145 = vld [vmem:[#allocation3 + $0x10] sm:$0xff]
    %v146 = vld [vmem:[#allocation3 + $0x18] sm:$0xff]
    %v147 = vpack.c.bf16 %v144, %v143
    %v148 = vpack.c.bf16 %v146, %v145
    %v149 = vld [vmem:[#allocation9] sm:$0xf]
    %v150 = vld [vmem:[#allocation9 + $0x4] sm:$0xf]
    %v151 = vld [vmem:[#allocation9 + $0x8] sm:$0xf]
    %v152 = vld [vmem:[#allocation9 + $0xc] sm:$0xf]
    %v153 = vld [vmem:[#allocation9 + $0x10] sm:$0xf]
    %v154 = vld [vmem:[#allocation9 + $0x14] sm:$0xf]
    %v155 = vld [vmem:[#allocation9 + $0x18] sm:$0xf]
    %v156 = vld [vmem:[#allocation9 + $0x1c] sm:$0xf]
    %v157 = vld [vmem:[#allocation9 + $0x20] sm:$0xf]
    %v158 = vld [vmem:[#allocation9 + $0x24] sm:$0xf]
    %v159 = vld [vmem:[#allocation9 + $0x28] sm:$0xf]
    %v160 = vld [vmem:[#allocation9 + $0x2c] sm:$0xf]
    %v161 = vld [vmem:[#allocation9 + $0x30] sm:$0xf]
    %v162 = vld [vmem:[#allocation9 + $0x34] sm:$0xf]
    %v163 = vld [vmem:[#allocation9 + $0x38] sm:$0xf]
    %v164 = vld [vmem:[#allocation9 + $0x3c] sm:$0xf]
    %v165 = vld [vmem:[%s6] sm:$0x1]
    %v167 = vlaneseq
    %v168 = vshrl.u32 %v167, 7
    %v169 = vsub.s32 0, %v168
    %v170 = vrot.slane %v165, %v169
    %v188 = vunpack.c.l.b16 %v149
    %v189 = vunpack.c.l.b16 %v150
    %v190 = vunpack.c.l.b16 %v151
    %v191 = vunpack.c.l.b16 %v152
    %v192 = vunpack.c.l.b16 %v153
    %v193 = vunpack.c.l.b16 %v154
    %v194 = vunpack.c.l.b16 %v155
    %v195 = vunpack.c.l.b16 %v156
    %v196 = vunpack.c.l.b16 %v157
    %v197 = vunpack.c.l.b16 %v158
    %v198 = vunpack.c.l.b16 %v159
    %v199 = vunpack.c.l.b16 %v160
    %v200 = vunpack.c.l.b16 %v161
    %v201 = vunpack.c.l.b16 %v162
    %v202 = vunpack.c.l.b16 %v163
    %v203 = vunpack.c.l.b16 %v164
    %v204 = vpack.c.b16 %v189, %v188
    %v205 = vpack.c.b16 %v191, %v190
    %v206 = vpack.c.b16 %v193, %v192
    %v207 = vpack.c.b16 %v195, %v194
    %v208 = vpack.c.b16 %v197, %v196
    %v209 = vpack.c.b16 %v199, %v198
    %v210 = vpack.c.b16 %v201, %v200
    %v211 = vpack.c.b16 %v203, %v202
    %220 = vmatprep.subr.bf16.mxu0 0
    %221 = vmatpush1.bf16.msra.mxu0 %v204
    %222 = vmatprep.subr.bf16.mxu0 0
    %223 = vmatpush1.bf16.msra.mxu0 %v205
    %224 = vmatprep.subr.bf16.mxu0 0
    %225 = vmatpush1.bf16.msra.mxu0 %v206
    %226 = vmatprep.subr.bf16.mxu0 0
    %227 = vmatpush1.bf16.msra.mxu0 %v207
    %228 = vmatprep.subr.bf16.mxu0 0
    %229 = vmatpush1.bf16.msra.mxu0 %v208
    %230 = vmatprep.subr.bf16.mxu0 0
    %231 = vmatpush1.bf16.msra.mxu0 %v209
    %232 = vmatprep.subr.bf16.mxu0 0
    %233 = vmatpush1.bf16.msra.mxu0 %v210
    %234 = vmatprep.subr.bf16.mxu0 0
    %235 = vmatpush1.bf16.msra.mxu0 %v211
    %236 = vmatprep.subr.bf16.mxu0 0
    %237 = vmatpush1.bf16.msra.mxu0 0
    %238 = vmatprep.subr.bf16.mxu0 0
    %239 = vmatpush1.bf16.msra.mxu0 0
    %240 = vmatprep.subr.bf16.mxu0 0
    %241 = vmatpush1.bf16.msra.mxu0 0
    %242 = vmatprep.subr.bf16.mxu0 0
    %243 = vmatpush1.bf16.msra.mxu0 0
    %244 = vmatprep.subr.bf16.mxu0 0
    %245 = vmatpush1.bf16.msra.mxu0 0
    %246 = vmatprep.subr.bf16.mxu0 0
    %247 = vmatpush1.bf16.msra.mxu0 0
    %248 = vmatprep.subr.bf16.mxu0 0
    %249 = vmatpush1.bf16.msra.mxu0 0
    %250 = vmatprep.subr.bf16.mxu0 0
    %251 = vmatpush1.bf16.msra.mxu0 0
    %252 = vmatprep.mubr.bf16.mxu0 0
    %253 = vmatmul.mubr.bf16.gmra.mrb[0].mxu0 %v147
    %v254 = vpop.f32.mrb[0].mxu0
    %v255 = vadd.f32 %v170, %v254
    %v256 = vpop.f32.mrb[0].mxu0
    %v257 = vpop.f32.mrb[0].mxu0
    %v258 = vadd.f32 %v170, %v257
    %v259 = vpop.f32.mrb[0].mxu0
    %260 = vmatprep.mubr.bf16.mxu0 0
    %261 = vmatmul.mubr.bf16.gmra.mrb[0].mxu0 %v148
    %v262 = vpop.f32.mrb[0].mxu0
    %v263 = vadd.f32 %v170, %v262
    %v264 = vpop.f32.mrb[0].mxu0
    %v265 = vpop.f32.mrb[0].mxu0
    %v266 = vadd.f32 %v170, %v265
    %v267 = vpop.f32.mrb[0].mxu0
    %268 = vdwg.mxu0
    %269 = vst [vmem:[#allocation2 + $0x8] sm:$0xff] %v147
    %270 = vst [vmem:[#allocation2 + $0x18] sm:$0xff] %v148
    %v271 = vld [vmem:[#allocation2] sm:$0x80]
    %v272 = vld [vmem:[#allocation2 + $0x8] sm:$0x7f]
    %v273 = vld [vmem:[#allocation2 + $0x10] sm:$0x80]
    %v274 = vld [vmem:[#allocation2 + $0x18] sm:$0x7f]
    %v275 = vld [vmem:[#allocation2 + $0x8] sm:$0xff]
    %v276 = vld [vmem:[#allocation2 + $0x18] sm:$0xff]
    %vm277 = vsmask.f32 7424
    %v279 = vshrl.u32 %v271, 16
    %v282 = vshll.u32 %v275, 16
    %v284 = vrot.slane %v282, 1
    %v285 = vsel %vm277, %v279, %v284
    %v286 = vshrl.u32 %v275, 16
    %v288 = vor.u32 %v286, %v284
    %v290 = vshrl.u32 %v273, 16
    %v293 = vshll.u32 %v276, 16
    %v295 = vrot.slane %v293, 1
    %v296 = vsel %vm277, %v290, %v295
    %v297 = vshrl.u32 %v276, 16
    %v299 = vor.u32 %v297, %v295
    %v302 = vrot.slane %v275, 1
    %v303 = vrot.slane %v276, 1
    %vm308 = vcmask 1040384
    %v309 = vrot.slane %v271, 7
    %v310 = vrot.slane %v272, 7
    %v311 = vsel %vm308, %v309, %v310
    %v312 = vrot.slane %v285, 7
    %v313 = vrot.slane %v288, 7
    %v314 = vsel %vm308, %v312, %v313
    %v315 = vrot.slane %v302, 7
    %v316 = vsel %vm308, %v315, %v315
    %v317 = vrot.slane %v273, 7
    %v318 = vrot.slane %v274, 7
    %v319 = vsel %vm308, %v317, %v318
    %v320 = vrot.slane %v296, 7
    %v321 = vrot.slane %v299, 7
    %v322 = vsel %vm308, %v320, %v321
    %v323 = vrot.slane %v303, 7
    %v324 = vsel %vm308, %v323, %v323
    %v331 = vld [vmem:[#allocation6] sm:$0xf]
    %v332 = vld [vmem:[#allocation6 + $0x4] sm:$0xf]
    %v333 = vld [vmem:[#allocation6 + $0x8] sm:$0xf]
    %v334 = vld [vmem:[#allocation6 + $0xc] sm:$0xf]
    %v335 = vld [vmem:[#allocation6 + $0x10] sm:$0xf]
    %v336 = vld [vmem:[#allocation6 + $0x14] sm:$0xf]
    %v337 = vld [vmem:[#allocation6 + $0x18] sm:$0xf]
    %v338 = vld [vmem:[#allocation6 + $0x1c] sm:$0xf]
    %v339 = vld [vmem:[#allocation6 + $0x20] sm:$0xf]
    %v340 = vld [vmem:[#allocation6 + $0x24] sm:$0xf]
    %v341 = vld [vmem:[#allocation6 + $0x28] sm:$0xf]
    %v342 = vld [vmem:[#allocation6 + $0x2c] sm:$0xf]
    %v343 = vld [vmem:[#allocation6 + $0x30] sm:$0xf]
    %v344 = vld [vmem:[#allocation6 + $0x34] sm:$0xf]
    %v345 = vld [vmem:[#allocation6 + $0x38] sm:$0xf]
    %v346 = vld [vmem:[#allocation6 + $0x3c] sm:$0xf]
    %v347 = vld [vmem:[#allocation6 + $0x40] sm:$0xf]
    %v348 = vld [vmem:[#allocation6 + $0x44] sm:$0xf]
    %v349 = vld [vmem:[#allocation6 + $0x48] sm:$0xf]
    %v350 = vld [vmem:[#allocation6 + $0x4c] sm:$0xf]
    %v351 = vld [vmem:[#allocation6 + $0x50] sm:$0xf]
    %v352 = vld [vmem:[#allocation6 + $0x54] sm:$0xf]
    %v353 = vld [vmem:[#allocation6 + $0x58] sm:$0xf]
    %v354 = vld [vmem:[#allocation6 + $0x5c] sm:$0xf]
    %v355 = vld [vmem:[#allocation6 + $0x60] sm:$0xf]
    %v356 = vld [vmem:[#allocation6 + $0x64] sm:$0xf]
    %v357 = vld [vmem:[#allocation6 + $0x68] sm:$0xf]
    %v358 = vld [vmem:[#allocation6 + $0x6c] sm:$0xf]
    %v359 = vld [vmem:[#allocation6 + $0x70] sm:$0xf]
    %v360 = vld [vmem:[#allocation6 + $0x74] sm:$0xf]
    %v361 = vld [vmem:[#allocation6 + $0x78] sm:$0xf]
    %v362 = vld [vmem:[#allocation6 + $0x7c] sm:$0xf]
    %v363 = vld [vmem:[#allocation6 + $0x80] sm:$0xf]
    %v364 = vld [vmem:[#allocation6 + $0x84] sm:$0xf]
    %v365 = vld [vmem:[#allocation6 + $0x88] sm:$0xf]
    %v366 = vld [vmem:[#allocation6 + $0x8c] sm:$0xf]
    %v367 = vld [vmem:[#allocation6 + $0x90] sm:$0xf]
    %v368 = vld [vmem:[#allocation6 + $0x94] sm:$0xf]
    %v369 = vld [vmem:[#allocation6 + $0x98] sm:$0xf]
    %v370 = vld [vmem:[#allocation6 + $0x9c] sm:$0xf]
    %v371 = vld [vmem:[#allocation6 + $0xa0] sm:$0xf]
    %v372 = vld [vmem:[#allocation6 + $0xa4] sm:$0xf]
    %v373 = vld [vmem:[#allocation6 + $0xa8] sm:$0xf]
    %v374 = vld [vmem:[#allocation6 + $0xac] sm:$0xf]
    %v375 = vld [vmem:[#allocation6 + $0xb0] sm:$0xf]
    %v376 = vld [vmem:[#allocation6 + $0xb4] sm:$0xf]
    %v377 = vld [vmem:[#allocation6 + $0xb8] sm:$0xf]
    %v378 = vld [vmem:[#allocation6 + $0xbc] sm:$0xf]
    %v379 = vld [vmem:[%s2] sm:$0x1]
    %v381 = vlaneseq
    %v382 = vshrl.u32 %v381, 7
    %v383 = vsub.s32 0, %v382
    %v384 = vrot.slane %v379, %v383
    %v434 = vunpack.c.l.b16 %v331
    %v435 = vunpack.c.l.b16 %v332
    %v436 = vunpack.c.l.b16 %v333
    %v437 = vunpack.c.l.b16 %v334
    %v438 = vunpack.c.l.b16 %v335
    %v439 = vunpack.c.l.b16 %v336
    %v440 = vunpack.c.l.b16 %v337
    %v441 = vunpack.c.l.b16 %v338
    %v442 = vunpack.c.l.b16 %v339
    %v443 = vunpack.c.l.b16 %v340
    %v444 = vunpack.c.l.b16 %v341
    %v445 = vunpack.c.l.b16 %v342
    %v446 = vunpack.c.l.b16 %v343
    %v447 = vunpack.c.l.b16 %v344
    %v448 = vunpack.c.l.b16 %v345
    %v449 = vunpack.c.l.b16 %v346
    %v450 = vunpack.c.l.b16 %v347
    %v451 = vunpack.c.l.b16 %v348
    %v452 = vunpack.c.l.b16 %v349
    %v453 = vunpack.c.l.b16 %v350
    %v454 = vunpack.c.l.b16 %v351
    %v455 = vunpack.c.l.b16 %v352
    %v456 = vunpack.c.l.b16 %v353
    %v457 = vunpack.c.l.b16 %v354
    %v458 = vunpack.c.l.b16 %v355
    %v459 = vunpack.c.l.b16 %v356
    %v460 = vunpack.c.l.b16 %v357
    %v461 = vunpack.c.l.b16 %v358
    %v462 = vunpack.c.l.b16 %v359
    %v463 = vunpack.c.l.b16 %v360
    %v464 = vunpack.c.l.b16 %v361
    %v465 = vunpack.c.l.b16 %v362
    %v466 = vunpack.c.l.b16 %v363
    %v467 = vunpack.c.l.b16 %v364
    %v468 = vunpack.c.l.b16 %v365
    %v469 = vunpack.c.l.b16 %v366
    %v470 = vunpack.c.l.b16 %v367
    %v471 = vunpack.c.l.b16 %v368
    %v472 = vunpack.c.l.b16 %v369
    %v473 = vunpack.c.l.b16 %v370
    %v474 = vunpack.c.l.b16 %v371
    %v475 = vunpack.c.l.b16 %v372
    %v476 = vunpack.c.l.b16 %v373
    %v477 = vunpack.c.l.b16 %v374
    %v478 = vunpack.c.l.b16 %v375
    %v479 = vunpack.c.l.b16 %v376
    %v480 = vunpack.c.l.b16 %v377
    %v481 = vunpack.c.l.b16 %v378
    %v482 = vpack.c.b16 %v435, %v434
    %v483 = vpack.c.b16 %v437, %v436
    %v484 = vpack.c.b16 %v439, %v438
    %v485 = vpack.c.b16 %v441, %v440
    %v486 = vpack.c.b16 %v443, %v442
    %v487 = vpack.c.b16 %v445, %v444
    %v488 = vpack.c.b16 %v447, %v446
    %v489 = vpack.c.b16 %v449, %v448
    %v490 = vpack.c.b16 %v451, %v450
    %v491 = vpack.c.b16 %v453, %v452
    %v492 = vpack.c.b16 %v455, %v454
    %v493 = vpack.c.b16 %v457, %v456
    %v494 = vpack.c.b16 %v459, %v458
    %v495 = vpack.c.b16 %v461, %v460
    %v496 = vpack.c.b16 %v463, %v462
    %v497 = vpack.c.b16 %v465, %v464
    %v498 = vpack.c.b16 %v467, %v466
    %v499 = vpack.c.b16 %v469, %v468
    %v500 = vpack.c.b16 %v471, %v470
    %v501 = vpack.c.b16 %v473, %v472
    %v502 = vpack.c.b16 %v475, %v474
    %v503 = vpack.c.b16 %v477, %v476
    %v504 = vpack.c.b16 %v479, %v478
    %v505 = vpack.c.b16 %v481, %v480
    %530 = vmatprep.subr.bf16.mxu0 0
    %531 = vmatpush1.bf16.msra.mxu0 %v482
    %532 = vmatprep.subr.bf16.mxu0 0
    %533 = vmatpush1.bf16.msra.mxu0 %v483
    %534 = vmatprep.subr.bf16.mxu0 0
    %535 = vmatpush1.bf16.msra.mxu0 %v484
    %536 = vmatprep.subr.bf16.mxu0 0
    %537 = vmatpush1.bf16.msra.mxu0 %v485
    %538 = vmatprep.subr.bf16.mxu0 0
    %539 = vmatpush1.bf16.msra.mxu0 %v486
    %540 = vmatprep.subr.bf16.mxu0 0
    %541 = vmatpush1.bf16.msra.mxu0 %v487
    %542 = vmatprep.subr.bf16.mxu0 0
    %543 = vmatpush1.bf16.msra.mxu0 %v488
    %544 = vmatprep.subr.bf16.mxu0 0
    %545 = vmatpush1.bf16.msra.mxu0 %v489
    %546 = vmatprep.subr.bf16.mxu0 0
    %547 = vmatpush1.bf16.msra.mxu0 %v490
    %548 = vmatprep.subr.bf16.mxu0 0
    %549 = vmatpush1.bf16.msra.mxu0 %v491
    %550 = vmatprep.subr.bf16.mxu0 0
    %551 = vmatpush1.bf16.msra.mxu0 %v492
    %552 = vmatprep.subr.bf16.mxu0 0
    %553 = vmatpush1.bf16.msra.mxu0 %v493
    %554 = vmatprep.subr.bf16.mxu0 0
    %555 = vmatpush1.bf16.msra.mxu0 %v494
    %556 = vmatprep.subr.bf16.mxu0 0
    %557 = vmatpush1.bf16.msra.mxu0 %v495
    %558 = vmatprep.subr.bf16.mxu0 0
    %559 = vmatpush1.bf16.msra.mxu0 %v496
    %560 = vmatprep.subr.bf16.mxu0 0
    %561 = vmatpush1.bf16.msra.mxu0 %v497
    %562 = vmatprep.mubr.bf16.mxu0 %v314
    %563 = vmatmul.mubr.bf16.gmra.mrb[0].mxu0 %v311
    %v564 = vpop.f32.mrb[0].mxu0
    %v565 = vadd.f32 %v384, %v564
    %v566 = vpop.f32.mrb[0].mxu0
    %v567 = vpop.f32.mrb[0].mxu0
    %v568 = vadd.f32 %v384, %v567
    %v569 = vpop.f32.mrb[0].mxu0
    %570 = vmatprep.mubr.bf16.mxu0 %v322
    %571 = vmatmul.mubr.bf16.gmra.mrb[0].mxu0 %v319
    %v572 = vpop.f32.mrb[0].mxu0
    %v573 = vadd.f32 %v384, %v572
    %v574 = vpop.f32.mrb[0].mxu0
    %v575 = vpop.f32.mrb[0].mxu0
    %v576 = vadd.f32 %v384, %v575
    %v577 = vpop.f32.mrb[0].mxu0
    %578 = vdwg.mxu0
    %579 = vmatprep.subr.bf16.mxu0 0
    %580 = vmatpush1.bf16.msra.mxu0 %v498
    %581 = vmatprep.subr.bf16.mxu0 0
    %582 = vmatpush1.bf16.msra.mxu0 %v499
    %583 = vmatprep.subr.bf16.mxu0 0
    %584 = vmatpush1.bf16.msra.mxu0 %v500
    %585 = vmatprep.subr.bf16.mxu0 0
    %586 = vmatpush1.bf16.msra.mxu0 %v501
    %587 = vmatprep.subr.bf16.mxu0 0
    %588 = vmatpush1.bf16.msra.mxu0 %v502
    %589 = vmatprep.subr.bf16.mxu0 0
    %590 = vmatpush1.bf16.msra.mxu0 %v503
    %591 = vmatprep.subr.bf16.mxu0 0
    %592 = vmatpush1.bf16.msra.mxu0 %v504
    %593 = vmatprep.subr.bf16.mxu0 0
    %594 = vmatpush1.bf16.msra.mxu0 %v505
    %595 = vmatprep.subr.bf16.mxu0 0
    %596 = vmatpush1.bf16.msra.mxu0 0
    %597 = vmatprep.subr.bf16.mxu0 0
    %598 = vmatpush1.bf16.msra.mxu0 0
    %599 = vmatprep.subr.bf16.mxu0 0
    %600 = vmatpush1.bf16.msra.mxu0 0
    %601 = vmatprep.subr.bf16.mxu0 0
    %602 = vmatpush1.bf16.msra.mxu0 0
    %603 = vmatprep.subr.bf16.mxu0 0
    %604 = vmatpush1.bf16.msra.mxu0 0
    %605 = vmatprep.subr.bf16.mxu0 0
    %606 = vmatpush1.bf16.msra.mxu0 0
    %607 = vmatprep.subr.bf16.mxu0 0
    %608 = vmatpush1.bf16.msra.mxu0 0
    %609 = vmatprep.subr.bf16.mxu0 0
    %610 = vmatpush1.bf16.msra.mxu0 0
    %611 = vmatprep.mubr.bf16.mxu0 0
    %612 = vmatmul.mubr.bf16.gmra.mrb[0].mxu0 %v316
    %v613 = vpop.f32.mrb[0].mxu0
    %v614 = vadd.f32 %v565, %v613
    %v615 = vpop.f32.mrb[0].mxu0
    %v616 = vpop.f32.mrb[0].mxu0
    %v617 = vadd.f32 %v568, %v616
    %v618 = vpop.f32.mrb[0].mxu0
    %619 = vmatprep.mubr.bf16.mxu0 0
    %620 = vmatmul.mubr.bf16.gmra.mrb[0].mxu0 %v324
    %v621 = vpop.f32.mrb[0].mxu0
    %v622 = vadd.f32 %v573, %v621
    %v623 = vpop.f32.mrb[0].mxu0
    %v624 = vpop.f32.mrb[0].mxu0
    %v625 = vadd.f32 %v576, %v624
    %v626 = vpop.f32.mrb[0].mxu0
    %627 = vdwg.mxu0
    %v628 = vmax.f32 %v614, 0.0
    %v629 = vmax.f32 %v617, 0.0
    %v630 = vmax.f32 %v622, 0.0
    %v631 = vmax.f32 %v625, 0.0
    %v632 = vpack.c.bf16 %v629, %v628
    %v633 = vpack.c.bf16 %v631, %v630
    %634 = vst [vmem:[#allocation2 + $0x8] sm:$0xff] %v632
    %635 = vst [vmem:[#allocation2 + $0x18] sm:$0xff] %v633
    %v636 = vld [vmem:[#allocation2] sm:$0x80]
    %v637 = vld [vmem:[#allocation2 + $0x8] sm:$0x7f]
    %v638 = vld [vmem:[#allocation2 + $0x10] sm:$0x80]
    %v639 = vld [vmem:[#allocation2 + $0x18] sm:$0x7f]
    %v640 = vld [vmem:[#allocation2 + $0x8] sm:$0xff]
    %v641 = vld [vmem:[#allocation2 + $0x18] sm:$0xff]
    %v643 = vshrl.u32 %v636, 16
    %v646 = vshll.u32 %v640, 16
    %v648 = vrot.slane %v646, 1
    %v649 = vsel %vm277, %v643, %v648
    %v650 = vshrl.u32 %v640, 16
    %v652 = vor.u32 %v650, %v648
    %v654 = vshrl.u32 %v638, 16
    %v657 = vshll.u32 %v641, 16
    %v659 = vrot.slane %v657, 1
    %v660 = vsel %vm277, %v654, %v659
    %v661 = vshrl.u32 %v641, 16
    %v663 = vor.u32 %v661, %v659
    %v666 = vrot.slane %v640, 1
    %v667 = vrot.slane %v641, 1
    %v672 = vrot.slane %v636, 7
    %v673 = vrot.slane %v637, 7
    %v674 = vsel %vm308, %v672, %v673
    %v675 = vrot.slane %v649, 7
    %v676 = vrot.slane %v652, 7
    %v677 = vsel %vm308, %v675, %v676
    %v678 = vrot.slane %v666, 7
    %v679 = vsel %vm308, %v678, %v678
    %v680 = vrot.slane %v638, 7
    %v681 = vrot.slane %v639, 7
    %v682 = vsel %vm308, %v680, %v681
    %v683 = vrot.slane %v660, 7
    %v684 = vrot.slane %v663, 7
    %v685 = vsel %vm308, %v683, %v684
    %v686 = vrot.slane %v667, 7
    %v687 = vsel %vm308, %v686, %v686
    %v694 = vld [vmem:[#allocation8] sm:$0xf]
    %v695 = vld [vmem:[#allocation8 + $0x4] sm:$0xf]
    %v696 = vld [vmem:[#allocation8 + $0x8] sm:$0xf]
    %v697 = vld [vmem:[#allocation8 + $0xc] sm:$0xf]
    %v698 = vld [vmem:[#allocation8 + $0x10] sm:$0xf]
    %v699 = vld [vmem:[#allocation8 + $0x14] sm:$0xf]
    %v700 = vld [vmem:[#allocation8 + $0x18] sm:$0xf]
    %v701 = vld [vmem:[#allocation8 + $0x1c] sm:$0xf]
    %v702 = vld [vmem:[#allocation8 + $0x20] sm:$0xf]
    %v703 = vld [vmem:[#allocation8 + $0x24] sm:$0xf]
    %v704 = vld [vmem:[#allocation8 + $0x28] sm:$0xf]
    %v705 = vld [vmem:[#allocation8 + $0x2c] sm:$0xf]
    %v706 = vld [vmem:[#allocation8 + $0x30] sm:$0xf]
    %v707 = vld [vmem:[#allocation8 + $0x34] sm:$0xf]
    %v708 = vld [vmem:[#allocation8 + $0x38] sm:$0xf]
    %v709 = vld [vmem:[#allocation8 + $0x3c] sm:$0xf]
    %v710 = vld [vmem:[#allocation8 + $0x40] sm:$0xf]
    %v711 = vld [vmem:[#allocation8 + $0x44] sm:$0xf]
    %v712 = vld [vmem:[#allocation8 + $0x48] sm:$0xf]
    %v713 = vld [vmem:[#allocation8 + $0x4c] sm:$0xf]
    %v714 = vld [vmem:[#allocation8 + $0x50] sm:$0xf]
    %v715 = vld [vmem:[#allocation8 + $0x54] sm:$0xf]
    %v716 = vld [vmem:[#allocation8 + $0x58] sm:$0xf]
    %v717 = vld [vmem:[#allocation8 + $0x5c] sm:$0xf]
    %v718 = vld [vmem:[#allocation8 + $0x60] sm:$0xf]
    %v719 = vld [vmem:[#allocation8 + $0x64] sm:$0xf]
    %v720 = vld [vmem:[#allocation8 + $0x68] sm:$0xf]
    %v721 = vld [vmem:[#allocation8 + $0x6c] sm:$0xf]
    %v722 = vld [vmem:[#allocation8 + $0x70] sm:$0xf]
    %v723 = vld [vmem:[#allocation8 + $0x74] sm:$0xf]
    %v724 = vld [vmem:[#allocation8 + $0x78] sm:$0xf]
    %v725 = vld [vmem:[#allocation8 + $0x7c] sm:$0xf]
    %v726 = vld [vmem:[#allocation8 + $0x80] sm:$0xf]
    %v727 = vld [vmem:[#allocation8 + $0x84] sm:$0xf]
    %v728 = vld [vmem:[#allocation8 + $0x88] sm:$0xf]
    %v729 = vld [vmem:[#allocation8 + $0x8c] sm:$0xf]
    %v730 = vld [vmem:[#allocation8 + $0x90] sm:$0xf]
    %v731 = vld [vmem:[#allocation8 + $0x94] sm:$0xf]
    %v732 = vld [vmem:[#allocation8 + $0x98] sm:$0xf]
    %v733 = vld [vmem:[#allocation8 + $0x9c] sm:$0xf]
    %v734 = vld [vmem:[#allocation8 + $0xa0] sm:$0xf]
    %v735 = vld [vmem:[#allocation8 + $0xa4] sm:$0xf]
    %v736 = vld [vmem:[#allocation8 + $0xa8] sm:$0xf]
    %v737 = vld [vmem:[#allocation8 + $0xac] sm:$0xf]
    %v738 = vld [vmem:[#allocation8 + $0xb0] sm:$0xf]
    %v739 = vld [vmem:[#allocation8 + $0xb4] sm:$0xf]
    %v740 = vld [vmem:[#allocation8 + $0xb8] sm:$0xf]
    %v741 = vld [vmem:[#allocation8 + $0xbc] sm:$0xf]
    %v742 = vld [vmem:[%s4] sm:$0x1]
    %v744 = vlaneseq
    %v745 = vshrl.u32 %v744, 7
    %v746 = vsub.s32 0, %v745
    %v747 = vrot.slane %v742, %v746
    %v797 = vunpack.c.l.b16 %v694
    %v798 = vunpack.c.l.b16 %v695
    %v799 = vunpack.c.l.b16 %v696
    %v800 = vunpack.c.l.b16 %v697
    %v801 = vunpack.c.l.b16 %v698
    %v802 = vunpack.c.l.b16 %v699
    %v803 = vunpack.c.l.b16 %v700
    %v804 = vunpack.c.l.b16 %v701
    %v805 = vunpack.c.l.b16 %v702
    %v806 = vunpack.c.l.b16 %v703
    %v807 = vunpack.c.l.b16 %v704
    %v808 = vunpack.c.l.b16 %v705
    %v809 = vunpack.c.l.b16 %v706
    %v810 = vunpack.c.l.b16 %v707
    %v811 = vunpack.c.l.b16 %v708
    %v812 = vunpack.c.l.b16 %v709
    %v813 = vunpack.c.l.b16 %v710
    %v814 = vunpack.c.l.b16 %v711
    %v815 = vunpack.c.l.b16 %v712
    %v816 = vunpack.c.l.b16 %v713
    %v817 = vunpack.c.l.b16 %v714
    %v818 = vunpack.c.l.b16 %v715
    %v819 = vunpack.c.l.b16 %v716
    %v820 = vunpack.c.l.b16 %v717
    %v821 = vunpack.c.l.b16 %v718
    %v822 = vunpack.c.l.b16 %v719
    %v823 = vunpack.c.l.b16 %v720
    %v824 = vunpack.c.l.b16 %v721
    %v825 = vunpack.c.l.b16 %v722
    %v826 = vunpack.c.l.b16 %v723
    %v827 = vunpack.c.l.b16 %v724
    %v828 = vunpack.c.l.b16 %v725
    %v829 = vunpack.c.l.b16 %v726
    %v830 = vunpack.c.l.b16 %v727
    %v831 = vunpack.c.l.b16 %v728
    %v832 = vunpack.c.l.b16 %v729
    %v833 = vunpack.c.l.b16 %v730
    %v834 = vunpack.c.l.b16 %v731
    %v835 = vunpack.c.l.b16 %v732
    %v836 = vunpack.c.l.b16 %v733
    %v837 = vunpack.c.l.b16 %v734
    %v838 = vunpack.c.l.b16 %v735
    %v839 = vunpack.c.l.b16 %v736
    %v840 = vunpack.c.l.b16 %v737
    %v841 = vunpack.c.l.b16 %v738
    %v842 = vunpack.c.l.b16 %v739
    %v843 = vunpack.c.l.b16 %v740
    %v844 = vunpack.c.l.b16 %v741
    %v845 = vpack.c.b16 %v798, %v797
    %v846 = vpack.c.b16 %v800, %v799
    %v847 = vpack.c.b16 %v802, %v801
    %v848 = vpack.c.b16 %v804, %v803
    %v849 = vpack.c.b16 %v806, %v805
    %v850 = vpack.c.b16 %v808, %v807
    %v851 = vpack.c.b16 %v810, %v809
    %v852 = vpack.c.b16 %v812, %v811
    %v853 = vpack.c.b16 %v814, %v813
    %v854 = vpack.c.b16 %v816, %v815
    %v855 = vpack.c.b16 %v818, %v817
    %v856 = vpack.c.b16 %v820, %v819
    %v857 = vpack.c.b16 %v822, %v821
    %v858 = vpack.c.b16 %v824, %v823
    %v859 = vpack.c.b16 %v826, %v825
    %v860 = vpack.c.b16 %v828, %v827
    %v861 = vpack.c.b16 %v830, %v829
    %v862 = vpack.c.b16 %v832, %v831
    %v863 = vpack.c.b16 %v834, %v833
    %v864 = vpack.c.b16 %v836, %v835
    %v865 = vpack.c.b16 %v838, %v837
    %v866 = vpack.c.b16 %v840, %v839
    %v867 = vpack.c.b16 %v842, %v841
    %v868 = vpack.c.b16 %v844, %v843
    %893 = vmatprep.subr.bf16.mxu0 0
    %894 = vmatpush1.bf16.msra.mxu0 %v845
    %895 = vmatprep.subr.bf16.mxu0 0
    %896 = vmatpush1.bf16.msra.mxu0 %v846
    %897 = vmatprep.subr.bf16.mxu0 0
    %898 = vmatpush1.bf16.msra.mxu0 %v847
    %899 = vmatprep.subr.bf16.mxu0 0
    %900 = vmatpush1.bf16.msra.mxu0 %v848
    %901 = vmatprep.subr.bf16.mxu0 0
    %902 = vmatpush1.bf16.msra.mxu0 %v849
    %903 = vmatprep.subr.bf16.mxu0 0
    %904 = vmatpush1.bf16.msra.mxu0 %v850
    %905 = vmatprep.subr.bf16.mxu0 0
    %906 = vmatpush1.bf16.msra.mxu0 %v851
    %907 = vmatprep.subr.bf16.mxu0 0
    %908 = vmatpush1.bf16.msra.mxu0 %v852
    %909 = vmatprep.subr.bf16.mxu0 0
    %910 = vmatpush1.bf16.msra.mxu0 %v853
    %911 = vmatprep.subr.bf16.mxu0 0
    %912 = vmatpush1.bf16.msra.mxu0 %v854
    %913 = vmatprep.subr.bf16.mxu0 0
    %914 = vmatpush1.bf16.msra.mxu0 %v855
    %915 = vmatprep.subr.bf16.mxu0 0
    %916 = vmatpush1.bf16.msra.mxu0 %v856
    %917 = vmatprep.subr.bf16.mxu0 0
    %918 = vmatpush1.bf16.msra.mxu0 %v857
    %919 = vmatprep.subr.bf16.mxu0 0
    %920 = vmatpush1.bf16.msra.mxu0 %v858
    %921 = vmatprep.subr.bf16.mxu0 0
    %922 = vmatpush1.bf16.msra.mxu0 %v859
    %923 = vmatprep.subr.bf16.mxu0 0
    %924 = vmatpush1.bf16.msra.mxu0 %v860
    %925 = vmatprep.mubr.bf16.mxu0 %v677
    %926 = vmatmul.mubr.bf16.gmra.mrb[0].mxu0 %v674
    %v927 = vpop.f32.mrb[0].mxu0
    %v928 = vadd.f32 %v747, %v927
    %v929 = vpop.f32.mrb[0].mxu0
    %v930 = vpop.f32.mrb[0].mxu0
    %v931 = vadd.f32 %v747, %v930
    %v932 = vpop.f32.mrb[0].mxu0
    %933 = vmatprep.mubr.bf16.mxu0 %v685
    %934 = vmatmul.mubr.bf16.gmra.mrb[0].mxu0 %v682
    %v935 = vpop.f32.mrb[0].mxu0
    %v936 = vadd.f32 %v747, %v935
    %v937 = vpop.f32.mrb[0].mxu0
    %v938 = vpop.f32.mrb[0].mxu0
    %v939 = vadd.f32 %v747, %v938
    %v940 = vpop.f32.mrb[0].mxu0
    %941 = vdwg.mxu0
    %942 = vmatprep.subr.bf16.mxu0 0
    %943 = vmatpush1.bf16.msra.mxu0 %v861
    %944 = vmatprep.subr.bf16.mxu0 0
    %945 = vmatpush1.bf16.msra.mxu0 %v862
    %946 = vmatprep.subr.bf16.mxu0 0
    %947 = vmatpush1.bf16.msra.mxu0 %v863
    %948 = vmatprep.subr.bf16.mxu0 0
    %949 = vmatpush1.bf16.msra.mxu0 %v864
    %950 = vmatprep.subr.bf16.mxu0 0
    %951 = vmatpush1.bf16.msra.mxu0 %v865
    %952 = vmatprep.subr.bf16.mxu0 0
    %953 = vmatpush1.bf16.msra.mxu0 %v866
    %954 = vmatprep.subr.bf16.mxu0 0
    %955 = vmatpush1.bf16.msra.mxu0 %v867
    %956 = vmatprep.subr.bf16.mxu0 0
    %957 = vmatpush1.bf16.msra.mxu0 %v868
    %958 = vmatprep.subr.bf16.mxu0 0
    %959 = vmatpush1.bf16.msra.mxu0 0
    %960 = vmatprep.subr.bf16.mxu0 0
    %961 = vmatpush1.bf16.msra.mxu0 0
    %962 = vmatprep.subr.bf16.mxu0 0
    %963 = vmatpush1.bf16.msra.mxu0 0
    %964 = vmatprep.subr.bf16.mxu0 0
    %965 = vmatpush1.bf16.msra.mxu0 0
    %966 = vmatprep.subr.bf16.mxu0 0
    %967 = vmatpush1.bf16.msra.mxu0 0
    %968 = vmatprep.subr.bf16.mxu0 0
    %969 = vmatpush1.bf16.msra.mxu0 0
    %970 = vmatprep.subr.bf16.mxu0 0
    %971 = vmatpush1.bf16.msra.mxu0 0
    %972 = vmatprep.subr.bf16.mxu0 0
    %973 = vmatpush1.bf16.msra.mxu0 0
    %974 = vmatprep.mubr.bf16.mxu0 0
    %975 = vmatmul.mubr.bf16.gmra.mrb[0].mxu0 %v679
    %v976 = vpop.f32.mrb[0].mxu0
    %v977 = vadd.f32 %v928, %v976
    %v978 = vpop.f32.mrb[0].mxu0
    %v979 = vpop.f32.mrb[0].mxu0
    %v980 = vadd.f32 %v931, %v979
    %v981 = vpop.f32.mrb[0].mxu0
    %982 = vmatprep.mubr.bf16.mxu0 0
    %983 = vmatmul.mubr.bf16.gmra.mrb[0].mxu0 %v687
    %v984 = vpop.f32.mrb[0].mxu0
    %v985 = vadd.f32 %v936, %v984
    %v986 = vpop.f32.mrb[0].mxu0
    %v987 = vpop.f32.mrb[0].mxu0
    %v988 = vadd.f32 %v939, %v987
    %v989 = vpop.f32.mrb[0].mxu0
    %990 = vdwg.mxu0
    %v991 = vmax.f32 %v977, 0.0
    %v992 = vmax.f32 %v980, 0.0
    %v993 = vmax.f32 %v985, 0.0
    %v994 = vmax.f32 %v988, 0.0
    %v995 = vadd.f32 %v991, %v255
    %v996 = vadd.f32 %v992, %v258
    %v997 = vadd.f32 %v993, %v263
    %v998 = vadd.f32 %v994, %v266
    %v999 = vmax.f32 %v995, 0.0
    %v1000 = vmax.f32 %v996, 0.0
    %v1001 = vmax.f32 %v997, 0.0
    %v1002 = vmax.f32 %v998, 0.0
    %v1003 = vpack.c.bf16 %v1000, %v999
    %v1004 = vpack.c.bf16 %v1002, %v1001
    %1005 = vst [vmem:[#allocation2 + $0x8] sm:$0xff] %v1003
    %1006 = vst [vmem:[#allocation2 + $0x18] sm:$0xff] %v1004
    %v1007 = vld [vmem:[#allocation2] sm:$0xc0]
    %v1008 = vld [vmem:[#allocation2 + $0x8] sm:$0x3f]
    %v1009 = vld [vmem:[#allocation2 + $0x10] sm:$0xc0]
    %v1010 = vld [vmem:[#allocation2 + $0x18] sm:$0x3f]
    %v1011 = vld [vmem:[#allocation2] sm:$0x80]
    %v1012 = vld [vmem:[#allocation2 + $0x8] sm:$0x7f]
    %v1013 = vld [vmem:[#allocation2 + $0x10] sm:$0x80]
    %v1014 = vld [vmem:[#allocation2 + $0x18] sm:$0x7f]
    %v1015 = vld [vmem:[#allocation2 + $0x8] sm:$0xff]
    %v1016 = vld [vmem:[#allocation2 + $0x18] sm:$0xff]
    %vm1021 = vcmask 1046528
    %v1022 = vrot.slane %v1011, 1
    %v1023 = vrot.slane %v1012, 1
    %v1024 = vsel %vm1021, %v1022, %v1023
    %v1025 = vrot.slane %v1013, 1
    %v1026 = vrot.slane %v1014, 1
    %v1027 = vsel %vm1021, %v1025, %v1026
    %v1030 = vrot.slane %v1015, 2
    %v1031 = vrot.slane %v1016, 2
    %vm1036 = vcmask 1041408
    %v1037 = vrot.slane %v1007, 6
    %v1038 = vrot.slane %v1008, 6
    %v1039 = vsel %vm1036, %v1037, %v1038
    %v1040 = vrot.slane %v1024, 6
    %v1041 = vrot.slane %v1023, 6
    %v1042 = vsel %vm1036, %v1040, %v1041
    %v1043 = vrot.slane %v1030, 6
    %v1044 = vsel %vm1036, %v1043, %v1043
    %v1045 = vrot.slane %v1009, 6
    %v1046 = vrot.slane %v1010, 6
    %v1047 = vsel %vm1036, %v1045, %v1046
    %v1048 = vrot.slane %v1027, 6
    %v1049 = vrot.slane %v1026, 6
    %v1050 = vsel %vm1036, %v1048, %v1049
    %v1051 = vrot.slane %v1031, 6
    %v1052 = vsel %vm1036, %v1051, %v1051
    %v1059 = vld [vmem:[#allocation11] sm:$0xf]
    %v1060 = vld [vmem:[#allocation11 + $0x4] sm:$0xf]
    %v1061 = vld [vmem:[#allocation11 + $0x8] sm:$0xf]
    %v1062 = vld [vmem:[#allocation11 + $0xc] sm:$0xf]
    %v1063 = vld [vmem:[#allocation11 + $0x10] sm:$0xf]
    %v1064 = vld [vmem:[#allocation11 + $0x14] sm:$0xf]
    %v1065 = vld [vmem:[#allocation11 + $0x18] sm:$0xf]
    %v1066 = vld [vmem:[#allocation11 + $0x1c] sm:$0xf]
    %v1067 = vld [vmem:[#allocation11 + $0x20] sm:$0xf]
    %v1068 = vld [vmem:[#allocation11 + $0x24] sm:$0xf]
    %v1069 = vld [vmem:[#allocation11 + $0x28] sm:$0xf]
    %v1070 = vld [vmem:[#allocation11 + $0x2c] sm:$0xf]
    %v1071 = vld [vmem:[#allocation11 + $0x30] sm:$0xf]
    %v1072 = vld [vmem:[#allocation11 + $0x34] sm:$0xf]
    %v1073 = vld [vmem:[#allocation11 + $0x38] sm:$0xf]
    %v1074 = vld [vmem:[#allocation11 + $0x3c] sm:$0xf]
    %v1075 = vld [vmem:[#allocation11 + $0x40] sm:$0xf]
    %v1076 = vld [vmem:[#allocation11 + $0x44] sm:$0xf]
    %v1077 = vld [vmem:[#allocation11 + $0x48] sm:$0xf]
    %v1078 = vld [vmem:[#allocation11 + $0x4c] sm:$0xf]
    %v1079 = vld [vmem:[#allocation11 + $0x50] sm:$0xf]
    %v1080 = vld [vmem:[#allocation11 + $0x54] sm:$0xf]
    %v1081 = vld [vmem:[#allocation11 + $0x58] sm:$0xf]
    %v1082 = vld [vmem:[#allocation11 + $0x5c] sm:$0xf]
    %v1083 = vld [vmem:[#allocation11 + $0x60] sm:$0xf]
    %v1084 = vld [vmem:[#allocation11 + $0x64] sm:$0xf]
    %v1085 = vld [vmem:[#allocation11 + $0x68] sm:$0xf]
    %v1086 = vld [vmem:[#allocation11 + $0x6c] sm:$0xf]
    %v1087 = vld [vmem:[#allocation11 + $0x70] sm:$0xf]
    %v1088 = vld [vmem:[#allocation11 + $0x74] sm:$0xf]
    %v1089 = vld [vmem:[#allocation11 + $0x78] sm:$0xf]
    %v1090 = vld [vmem:[#allocation11 + $0x7c] sm:$0xf]
    %v1091 = vld [vmem:[#allocation11 + $0x80] sm:$0xf]
    %v1092 = vld [vmem:[#allocation11 + $0x84] sm:$0xf]
    %v1093 = vld [vmem:[#allocation11 + $0x88] sm:$0xf]
    %v1094 = vld [vmem:[#allocation11 + $0x8c] sm:$0xf]
    %v1095 = vld [vmem:[#allocation11 + $0x90] sm:$0xf]
    %v1096 = vld [vmem:[#allocation11 + $0x94] sm:$0xf]
    %v1097 = vld [vmem:[#allocation11 + $0x98] sm:$0xf]
    %v1098 = vld [vmem:[#allocation11 + $0x9c] sm:$0xf]
    %v1099 = vld [vmem:[#allocation11 + $0xa0] sm:$0xf]
    %v1100 = vld [vmem:[#allocation11 + $0xa4] sm:$0xf]
    %v1101 = vld [vmem:[#allocation11 + $0xa8] sm:$0xf]
    %v1102 = vld [vmem:[#allocation11 + $0xac] sm:$0xf]
    %v1103 = vld [vmem:[#allocation11 + $0xb0] sm:$0xf]
    %v1104 = vld [vmem:[#allocation11 + $0xb4] sm:$0xf]
    %v1105 = vld [vmem:[#allocation11 + $0xb8] sm:$0xf]
    %v1106 = vld [vmem:[#allocation11 + $0xbc] sm:$0xf]
    %v1107 = vld [vmem:[%s8] sm:$0x1]
    %v1109 = vlaneseq
    %v1110 = vshrl.u32 %v1109, 7
    %v1111 = vsub.s32 0, %v1110
    %v1112 = vrot.slane %v1107, %v1111
    %v1162 = vunpack.c.l.b16 %v1059
    %v1163 = vunpack.c.l.b16 %v1060
    %v1164 = vunpack.c.l.b16 %v1061
    %v1165 = vunpack.c.l.b16 %v1062
    %v1166 = vunpack.c.l.b16 %v1063
    %v1167 = vunpack.c.l.b16 %v1064
    %v1168 = vunpack.c.l.b16 %v1065
    %v1169 = vunpack.c.l.b16 %v1066
    %v1170 = vunpack.c.l.b16 %v1067
    %v1171 = vunpack.c.l.b16 %v1068
    %v1172 = vunpack.c.l.b16 %v1069
    %v1173 = vunpack.c.l.b16 %v1070
    %v1174 = vunpack.c.l.b16 %v1071
    %v1175 = vunpack.c.l.b16 %v1072
    %v1176 = vunpack.c.l.b16 %v1073
    %v1177 = vunpack.c.l.b16 %v1074
    %v1178 = vunpack.c.l.b16 %v1075
    %v1179 = vunpack.c.l.b16 %v1076
    %v1180 = vunpack.c.l.b16 %v1077
    %v1181 = vunpack.c.l.b16 %v1078
    %v1182 = vunpack.c.l.b16 %v1079
    %v1183 = vunpack.c.l.b16 %v1080
    %v1184 = vunpack.c.l.b16 %v1081
    %v1185 = vunpack.c.l.b16 %v1082
    %v1186 = vunpack.c.l.b16 %v1083
    %v1187 = vunpack.c.l.b16 %v1084
    %v1188 = vunpack.c.l.b16 %v1085
    %v1189 = vunpack.c.l.b16 %v1086
    %v1190 = vunpack.c.l.b16 %v1087
    %v1191 = vunpack.c.l.b16 %v1088
    %v1192 = vunpack.c.l.b16 %v1089
    %v1193 = vunpack.c.l.b16 %v1090
    %v1194 = vunpack.c.l.b16 %v1091
    %v1195 = vunpack.c.l.b16 %v1092
    %v1196 = vunpack.c.l.b16 %v1093
    %v1197 = vunpack.c.l.b16 %v1094
    %v1198 = vunpack.c.l.b16 %v1095
    %v1199 = vunpack.c.l.b16 %v1096
    %v1200 = vunpack.c.l.b16 %v1097
    %v1201 = vunpack.c.l.b16 %v1098
    %v1202 = vunpack.c.l.b16 %v1099
    %v1203 = vunpack.c.l.b16 %v1100
    %v1204 = vunpack.c.l.b16 %v1101
    %v1205 = vunpack.c.l.b16 %v1102
    %v1206 = vunpack.c.l.b16 %v1103
    %v1207 = vunpack.c.l.b16 %v1104
    %v1208 = vunpack.c.l.b16 %v1105
    %v1209 = vunpack.c.l.b16 %v1106
    %v1210 = vpack.c.b16 %v1163, %v1162
    %v1211 = vpack.c.b16 %v1165, %v1164
    %v1212 = vpack.c.b16 %v1167, %v1166
    %v1213 = vpack.c.b16 %v1169, %v1168
    %v1214 = vpack.c.b16 %v1171, %v1170
    %v1215 = vpack.c.b16 %v1173, %v1172
    %v1216 = vpack.c.b16 %v1175, %v1174
    %v1217 = vpack.c.b16 %v1177, %v1176
    %v1218 = vpack.c.b16 %v1179, %v1178
    %v1219 = vpack.c.b16 %v1181, %v1180
    %v1220 = vpack.c.b16 %v1183, %v1182
    %v1221 = vpack.c.b16 %v1185, %v1184
    %v1222 = vpack.c.b16 %v1187, %v1186
    %v1223 = vpack.c.b16 %v1189, %v1188
    %v1224 = vpack.c.b16 %v1191, %v1190
    %v1225 = vpack.c.b16 %v1193, %v1192
    %v1226 = vpack.c.b16 %v1195, %v1194
    %v1227 = vpack.c.b16 %v1197, %v1196
    %v1228 = vpack.c.b16 %v1199, %v1198
    %v1229 = vpack.c.b16 %v1201, %v1200
    %v1230 = vpack.c.b16 %v1203, %v1202
    %v1231 = vpack.c.b16 %v1205, %v1204
    %v1232 = vpack.c.b16 %v1207, %v1206
    %v1233 = vpack.c.b16 %v1209, %v1208
    %1258 = vmatprep.subr.bf16.mxu0 0
    %1259 = vmatpush1.bf16.msra.mxu0 %v1210
    %1260 = vmatprep.subr.bf16.mxu0 0
    %1261 = vmatpush1.bf16.msra.mxu0 %v1211
    %1262 = vmatprep.subr.bf16.mxu0 0
    %1263 = vmatpush1.bf16.msra.mxu0 %v1212
    %1264 = vmatprep.subr.bf16.mxu0 0
    %1265 = vmatpush1.bf16.msra.mxu0 %v1213
    %1266 = vmatprep.subr.bf16.mxu0 0
    %1267 = vmatpush1.bf16.msra.mxu0 %v1214
    %1268 = vmatprep.subr.bf16.mxu0 0
    %1269 = vmatpush1.bf16.msra.mxu0 %v1215
    %1270 = vmatprep.subr.bf16.mxu0 0
    %1271 = vmatpush1.bf16.msra.mxu0 %v1216
    %1272 = vmatprep.subr.bf16.mxu0 0
    %1273 = vmatpush1.bf16.msra.mxu0 %v1217
    %1274 = vmatprep.subr.bf16.mxu0 0
    %1275 = vmatpush1.bf16.msra.mxu0 %v1218
    %1276 = vmatprep.subr.bf16.mxu0 0
    %1277 = vmatpush1.bf16.msra.mxu0 %v1219
    %1278 = vmatprep.subr.bf16.mxu0 0
    %1279 = vmatpush1.bf16.msra.mxu0 %v1220
    %1280 = vmatprep.subr.bf16.mxu0 0
    %1281 = vmatpush1.bf16.msra.mxu0 %v1221
    %1282 = vmatprep.subr.bf16.mxu0 0
    %1283 = vmatpush1.bf16.msra.mxu0 %v1222
    %1284 = vmatprep.subr.bf16.mxu0 0
    %1285 = vmatpush1.bf16.msra.mxu0 %v1223
    %1286 = vmatprep.subr.bf16.mxu0 0
    %1287 = vmatpush1.bf16.msra.mxu0 %v1224
    %1288 = vmatprep.subr.bf16.mxu0 0
    %1289 = vmatpush1.bf16.msra.mxu0 %v1225
    %1290 = vmatprep.mubr.bf16.mxu0 %v1042
    %1291 = vmatmul.mubr.bf16.gmra.mrb[0].mxu0 %v1039
    %v1292 = vpop.f32.mrb[0].mxu0
    %v1293 = vadd.f32 %v1112, %v1292
    %v1294 = vpop.f32.mrb[0].mxu0
    %v1295 = vpop.f32.mrb[0].mxu0
    %v1296 = vadd.f32 %v1112, %v1295
    %v1297 = vpop.f32.mrb[0].mxu0
    %1298 = vmatprep.mubr.bf16.mxu0 %v1050
    %1299 = vmatmul.mubr.bf16.gmra.mrb[0].mxu0 %v1047
    %v1300 = vpop.f32.mrb[0].mxu0
    %v1301 = vadd.f32 %v1112, %v1300
    %v1302 = vpop.f32.mrb[0].mxu0
    %v1303 = vpop.f32.mrb[0].mxu0
    %v1304 = vadd.f32 %v1112, %v1303
    %v1305 = vpop.f32.mrb[0].mxu0
    %1306 = vdwg.mxu0
    %1307 = vmatprep.subr.bf16.mxu0 0
    %1308 = vmatpush1.bf16.msra.mxu0 %v1226
    %1309 = vmatprep.subr.bf16.mxu0 0
    %1310 = vmatpush1.bf16.msra.mxu0 %v1227
    %1311 = vmatprep.subr.bf16.mxu0 0
    %1312 = vmatpush1.bf16.msra.mxu0 %v1228
    %1313 = vmatprep.subr.bf16.mxu0 0
    %1314 = vmatpush1.bf16.msra.mxu0 %v1229
    %1315 = vmatprep.subr.bf16.mxu0 0
    %1316 = vmatpush1.bf16.msra.mxu0 %v1230
    %1317 = vmatprep.subr.bf16.mxu0 0
    %1318 = vmatpush1.bf16.msra.mxu0 %v1231
    %1319 = vmatprep.subr.bf16.mxu0 0
    %1320 = vmatpush1.bf16.msra.mxu0 %v1232
    %1321 = vmatprep.subr.bf16.mxu0 0
    %1322 = vmatpush1.bf16.msra.mxu0 %v1233
    %1323 = vmatprep.subr.bf16.mxu0 0
    %1324 = vmatpush1.bf16.msra.mxu0 0
    %1325 = vmatprep.subr.bf16.mxu0 0
    %1326 = vmatpush1.bf16.msra.mxu0 0
    %1327 = vmatprep.subr.bf16.mxu0 0
    %1328 = vmatpush1.bf16.msra.mxu0 0
    %1329 = vmatprep.subr.bf16.mxu0 0
    %1330 = vmatpush1.bf16.msra.mxu0 0
    %1331 = vmatprep.subr.bf16.mxu0 0
    %1332 = vmatpush1.bf16.msra.mxu0 0
    %1333 = vmatprep.subr.bf16.mxu0 0
    %1334 = vmatpush1.bf16.msra.mxu0 0
    %1335 = vmatprep.subr.bf16.mxu0 0
    %1336 = vmatpush1.bf16.msra.mxu0 0
    %1337 = vmatprep.subr.bf16.mxu0 0
    %1338 = vmatpush1.bf16.msra.mxu0 0
    %1339 = vmatprep.mubr.bf16.mxu0 0
    %1340 = vmatmul.mubr.bf16.gmra.mrb[0].mxu0 %v1044
    %v1341 = vpop.f32.mrb[0].mxu0
    %v1342 = vadd.f32 %v1293, %v1341
    %v1343 = vpop.f32.mrb[0].mxu0
    %v1344 = vpop.f32.mrb[0].mxu0
    %v1345 = vadd.f32 %v1296, %v1344
    %v1346 = vpop.f32.mrb[0].mxu0
    %1347 = vmatprep.mubr.bf16.mxu0 0
    %1348 = vmatmul.mubr.bf16.gmra.mrb[0].mxu0 %v1052
    %v1349 = vpop.f32.mrb[0].mxu0
    %v1350 = vadd.f32 %v1301, %v1349
    %v1351 = vpop.f32.mrb[0].mxu0
    %v1352 = vpop.f32.mrb[0].mxu0
    %v1353 = vadd.f32 %v1304, %v1352
    %v1354 = vpop.f32.mrb[0].mxu0
    %1355 = vdwg.mxu0
    %v1356 = vmax.f32 %v1342, 0.0
    %v1357 = vmax.f32 %v1345, 0.0
    %v1358 = vmax.f32 %v1350, 0.0
    %v1359 = vmax.f32 %v1353, 0.0
    %v1360 = vpack.c.bf16 %v1357, %v1356
    %v1361 = vpack.c.bf16 %v1359, %v1358
    %1362 = vst [vmem:[#allocation2 + $0x8] sm:$0xff] %v1360
    %1363 = vst [vmem:[#allocation2 + $0x18] sm:$0xff] %v1361
    %v1364 = vld [vmem:[#allocation2] sm:$0xc0]
    %v1365 = vld [vmem:[#allocation2 + $0x8] sm:$0x3f]
    %v1366 = vld [vmem:[#allocation2 + $0x10] sm:$0xc0]
    %v1367 = vld [vmem:[#allocation2 + $0x18] sm:$0x3f]
    %v1368 = vld [vmem:[#allocation2] sm:$0x80]
    %v1369 = vld [vmem:[#allocation2 + $0x8] sm:$0x7f]
    %v1370 = vld [vmem:[#allocation2 + $0x10] sm:$0x80]
    %v1371 = vld [vmem:[#allocation2 + $0x18] sm:$0x7f]
    %v1372 = vld [vmem:[#allocation2 + $0x8] sm:$0xff]
    %v1373 = vld [vmem:[#allocation2 + $0x18] sm:$0xff]
    %v1378 = vrot.slane %v1368, 1
    %v1379 = vrot.slane %v1369, 1
    %v1380 = vsel %vm1021, %v1378, %v1379
    %v1381 = vrot.slane %v1370, 1
    %v1382 = vrot.slane %v1371, 1
    %v1383 = vsel %vm1021, %v1381, %v1382
    %v1386 = vrot.slane %v1372, 2
    %v1387 = vrot.slane %v1373, 2
    %v1392 = vrot.slane %v1364, 6
    %v1393 = vrot.slane %v1365, 6
    %v1394 = vsel %vm1036, %v1392, %v1393
    %v1395 = vrot.slane %v1380, 6
    %v1396 = vrot.slane %v1379, 6
    %v1397 = vsel %vm1036, %v1395, %v1396
    %v1398 = vrot.slane %v1386, 6
    %v1399 = vsel %vm1036, %v1398, %v1398
    %v1400 = vrot.slane %v1366, 6
    %v1401 = vrot.slane %v1367, 6
    %v1402 = vsel %vm1036, %v1400, %v1401
    %v1403 = vrot.slane %v1383, 6
    %v1404 = vrot.slane %v1382, 6
    %v1405 = vsel %vm1036, %v1403, %v1404
    %v1406 = vrot.slane %v1387, 6
    %v1407 = vsel %vm1036, %v1406, %v1406
    %v1414 = vld [vmem:[#allocation12] sm:$0xf]
    %v1415 = vld [vmem:[#allocation12 + $0x4] sm:$0xf]
    %v1416 = vld [vmem:[#allocation12 + $0x8] sm:$0xf]
    %v1417 = vld [vmem:[#allocation12 + $0xc] sm:$0xf]
    %v1418 = vld [vmem:[#allocation12 + $0x10] sm:$0xf]
    %v1419 = vld [vmem:[#allocation12 + $0x14] sm:$0xf]
    %v1420 = vld [vmem:[#allocation12 + $0x18] sm:$0xf]
    %v1421 = vld [vmem:[#allocation12 + $0x1c] sm:$0xf]
    %v1422 = vld [vmem:[#allocation12 + $0x20] sm:$0xf]
    %v1423 = vld [vmem:[#allocation12 + $0x24] sm:$0xf]
    %v1424 = vld [vmem:[#allocation12 + $0x28] sm:$0xf]
    %v1425 = vld [vmem:[#allocation12 + $0x2c] sm:$0xf]
    %v1426 = vld [vmem:[#allocation12 + $0x30] sm:$0xf]
    %v1427 = vld [vmem:[#allocation12 + $0x34] sm:$0xf]
    %v1428 = vld [vmem:[#allocation12 + $0x38] sm:$0xf]
    %v1429 = vld [vmem:[#allocation12 + $0x3c] sm:$0xf]
    %v1430 = vld [vmem:[#allocation12 + $0x40] sm:$0xf]
    %v1431 = vld [vmem:[#allocation12 + $0x44] sm:$0xf]
    %v1432 = vld [vmem:[#allocation12 + $0x48] sm:$0xf]
    %v1433 = vld [vmem:[#allocation12 + $0x4c] sm:$0xf]
    %v1434 = vld [vmem:[#allocation12 + $0x50] sm:$0xf]
    %v1435 = vld [vmem:[#allocation12 + $0x54] sm:$0xf]
    %v1436 = vld [vmem:[#allocation12 + $0x58] sm:$0xf]
    %v1437 = vld [vmem:[#allocation12 + $0x5c] sm:$0xf]
    %v1438 = vld [vmem:[#allocation12 + $0x60] sm:$0xf]
    %v1439 = vld [vmem:[#allocation12 + $0x64] sm:$0xf]
    %v1440 = vld [vmem:[#allocation12 + $0x68] sm:$0xf]
    %v1441 = vld [vmem:[#allocation12 + $0x6c] sm:$0xf]
    %v1442 = vld [vmem:[#allocation12 + $0x70] sm:$0xf]
    %v1443 = vld [vmem:[#allocation12 + $0x74] sm:$0xf]
    %v1444 = vld [vmem:[#allocation12 + $0x78] sm:$0xf]
    %v1445 = vld [vmem:[#allocation12 + $0x7c] sm:$0xf]
    %v1446 = vld [vmem:[#allocation12 + $0x80] sm:$0xf]
    %v1447 = vld [vmem:[#allocation12 + $0x84] sm:$0xf]
    %v1448 = vld [vmem:[#allocation12 + $0x88] sm:$0xf]
    %v1449 = vld [vmem:[#allocation12 + $0x8c] sm:$0xf]
    %v1450 = vld [vmem:[#allocation12 + $0x90] sm:$0xf]
    %v1451 = vld [vmem:[#allocation12 + $0x94] sm:$0xf]
    %v1452 = vld [vmem:[#allocation12 + $0x98] sm:$0xf]
    %v1453 = vld [vmem:[#allocation12 + $0x9c] sm:$0xf]
    %v1454 = vld [vmem:[#allocation12 + $0xa0] sm:$0xf]
    %v1455 = vld [vmem:[#allocation12 + $0xa4] sm:$0xf]
    %v1456 = vld [vmem:[#allocation12 + $0xa8] sm:$0xf]
    %v1457 = vld [vmem:[#allocation12 + $0xac] sm:$0xf]
    %v1458 = vld [vmem:[#allocation12 + $0xb0] sm:$0xf]
    %v1459 = vld [vmem:[#allocation12 + $0xb4] sm:$0xf]
    %v1460 = vld [vmem:[#allocation12 + $0xb8] sm:$0xf]
    %v1461 = vld [vmem:[#allocation12 + $0xbc] sm:$0xf]
    %v1462 = vld [vmem:[%s10] sm:$0x1]
    %v1464 = vlaneseq
    %v1465 = vshrl.u32 %v1464, 7
    %v1466 = vsub.s32 0, %v1465
    %v1467 = vrot.slane %v1462, %v1466
    %v1517 = vunpack.c.l.b16 %v1414
    %v1518 = vunpack.c.l.b16 %v1415
    %v1519 = vunpack.c.l.b16 %v1416
    %v1520 = vunpack.c.l.b16 %v1417
    %v1521 = vunpack.c.l.b16 %v1418
    %v1522 = vunpack.c.l.b16 %v1419
    %v1523 = vunpack.c.l.b16 %v1420
    %v1524 = vunpack.c.l.b16 %v1421
    %v1525 = vunpack.c.l.b16 %v1422
    %v1526 = vunpack.c.l.b16 %v1423
    %v1527 = vunpack.c.l.b16 %v1424
    %v1528 = vunpack.c.l.b16 %v1425
    %v1529 = vunpack.c.l.b16 %v1426
    %v1530 = vunpack.c.l.b16 %v1427
    %v1531 = vunpack.c.l.b16 %v1428
    %v1532 = vunpack.c.l.b16 %v1429
    %v1533 = vunpack.c.l.b16 %v1430
    %v1534 = vunpack.c.l.b16 %v1431
    %v1535 = vunpack.c.l.b16 %v1432
    %v1536 = vunpack.c.l.b16 %v1433
    %v1537 = vunpack.c.l.b16 %v1434
    %v1538 = vunpack.c.l.b16 %v1435
    %v1539 = vunpack.c.l.b16 %v1436
    %v1540 = vunpack.c.l.b16 %v1437
    %v1541 = vunpack.c.l.b16 %v1438
    %v1542 = vunpack.c.l.b16 %v1439
    %v1543 = vunpack.c.l.b16 %v1440
    %v1544 = vunpack.c.l.b16 %v1441
    %v1545 = vunpack.c.l.b16 %v1442
    %v1546 = vunpack.c.l.b16 %v1443
    %v1547 = vunpack.c.l.b16 %v1444
    %v1548 = vunpack.c.l.b16 %v1445
    %v1549 = vunpack.c.l.b16 %v1446
    %v1550 = vunpack.c.l.b16 %v1447
    %v1551 = vunpack.c.l.b16 %v1448
    %v1552 = vunpack.c.l.b16 %v1449
    %v1553 = vunpack.c.l.b16 %v1450
    %v1554 = vunpack.c.l.b16 %v1451
    %v1555 = vunpack.c.l.b16 %v1452
    %v1556 = vunpack.c.l.b16 %v1453
    %v1557 = vunpack.c.l.b16 %v1454
    %v1558 = vunpack.c.l.b16 %v1455
    %v1559 = vunpack.c.l.b16 %v1456
    %v1560 = vunpack.c.l.b16 %v1457
    %v1561 = vunpack.c.l.b16 %v1458
    %v1562 = vunpack.c.l.b16 %v1459
    %v1563 = vunpack.c.l.b16 %v1460
    %v1564 = vunpack.c.l.b16 %v1461
    %v1565 = vpack.c.b16 %v1518, %v1517
    %v1566 = vpack.c.b16 %v1520, %v1519
    %v1567 = vpack.c.b16 %v1522, %v1521
    %v1568 = vpack.c.b16 %v1524, %v1523
    %v1569 = vpack.c.b16 %v1526, %v1525
    %v1570 = vpack.c.b16 %v1528, %v1527
    %v1571 = vpack.c.b16 %v1530, %v1529
    %v1572 = vpack.c.b16 %v1532, %v1531
    %v1573 = vpack.c.b16 %v1534, %v1533
    %v1574 = vpack.c.b16 %v1536, %v1535
    %v1575 = vpack.c.b16 %v1538, %v1537
    %v1576 = vpack.c.b16 %v1540, %v1539
    %v1577 = vpack.c.b16 %v1542, %v1541
    %v1578 = vpack.c.b16 %v1544, %v1543
    %v1579 = vpack.c.b16 %v1546, %v1545
    %v1580 = vpack.c.b16 %v1548, %v1547
    %v1581 = vpack.c.b16 %v1550, %v1549
    %v1582 = vpack.c.b16 %v1552, %v1551
    %v1583 = vpack.c.b16 %v1554, %v1553
    %v1584 = vpack.c.b16 %v1556, %v1555
    %v1585 = vpack.c.b16 %v1558, %v1557
    %v1586 = vpack.c.b16 %v1560, %v1559
    %v1587 = vpack.c.b16 %v1562, %v1561
    %v1588 = vpack.c.b16 %v1564, %v1563
    %1613 = vmatprep.subr.bf16.mxu0 0
    %1614 = vmatpush1.bf16.msra.mxu0 %v1565
    %1615 = vmatprep.subr.bf16.mxu0 0
    %1616 = vmatpush1.bf16.msra.mxu0 %v1566
    %1617 = vmatprep.subr.bf16.mxu0 0
    %1618 = vmatpush1.bf16.msra.mxu0 %v1567
    %1619 = vmatprep.subr.bf16.mxu0 0
    %1620 = vmatpush1.bf16.msra.mxu0 %v1568
    %1621 = vmatprep.subr.bf16.mxu0 0
    %1622 = vmatpush1.bf16.msra.mxu0 %v1569
    %1623 = vmatprep.subr.bf16.mxu0 0
    %1624 = vmatpush1.bf16.msra.mxu0 %v1570
    %1625 = vmatprep.subr.bf16.mxu0 0
    %1626 = vmatpush1.bf16.msra.mxu0 %v1571
    %1627 = vmatprep.subr.bf16.mxu0 0
    %1628 = vmatpush1.bf16.msra.mxu0 %v1572
    %1629 = vmatprep.subr.bf16.mxu0 0
    %1630 = vmatpush1.bf16.msra.mxu0 %v1573
    %1631 = vmatprep.subr.bf16.mxu0 0
    %1632 = vmatpush1.bf16.msra.mxu0 %v1574
    %1633 = vmatprep.subr.bf16.mxu0 0
    %1634 = vmatpush1.bf16.msra.mxu0 %v1575
    %1635 = vmatprep.subr.bf16.mxu0 0
    %1636 = vmatpush1.bf16.msra.mxu0 %v1576
    %1637 = vmatprep.subr.bf16.mxu0 0
    %1638 = vmatpush1.bf16.msra.mxu0 %v1577
    %1639 = vmatprep.subr.bf16.mxu0 0
    %1640 = vmatpush1.bf16.msra.mxu0 %v1578
    %1641 = vmatprep.subr.bf16.mxu0 0
    %1642 = vmatpush1.bf16.msra.mxu0 %v1579
    %1643 = vmatprep.subr.bf16.mxu0 0
    %1644 = vmatpush1.bf16.msra.mxu0 %v1580
    %1645 = vmatprep.mubr.bf16.mxu0 %v1397
    %1646 = vmatmul.mubr.bf16.gmra.mrb[0].mxu0 %v1394
    %v1647 = vpop.f32.mrb[0].mxu0
    %v1648 = vadd.f32 %v1467, %v1647
    %v1649 = vpop.f32.mrb[0].mxu0
    %v1650 = vpop.f32.mrb[0].mxu0
    %v1651 = vadd.f32 %v1467, %v1650
    %v1652 = vpop.f32.mrb[0].mxu0
    %1653 = vmatprep.mubr.bf16.mxu0 %v1405
    %1654 = vmatmul.mubr.bf16.gmra.mrb[0].mxu0 %v1402
    %v1655 = vpop.f32.mrb[0].mxu0
    %v1656 = vadd.f32 %v1467, %v1655
    %v1657 = vpop.f32.mrb[0].mxu0
    %v1658 = vpop.f32.mrb[0].mxu0
    %v1659 = vadd.f32 %v1467, %v1658
    %v1660 = vpop.f32.mrb[0].mxu0
    %1661 = vdwg.mxu0
    %1662 = vmatprep.subr.bf16.mxu0 0
    %1663 = vmatpush1.bf16.msra.mxu0 %v1581
    %1664 = vmatprep.subr.bf16.mxu0 0
    %1665 = vmatpush1.bf16.msra.mxu0 %v1582
    %1666 = vmatprep.subr.bf16.mxu0 0
    %1667 = vmatpush1.bf16.msra.mxu0 %v1583
    %1668 = vmatprep.subr.bf16.mxu0 0
    %1669 = vmatpush1.bf16.msra.mxu0 %v1584
    %1670 = vmatprep.subr.bf16.mxu0 0
    %1671 = vmatpush1.bf16.msra.mxu0 %v1585
    %1672 = vmatprep.subr.bf16.mxu0 0
    %1673 = vmatpush1.bf16.msra.mxu0 %v1586
    %1674 = vmatprep.subr.bf16.mxu0 0
    %1675 = vmatpush1.bf16.msra.mxu0 %v1587
    %1676 = vmatprep.subr.bf16.mxu0 0
    %1677 = vmatpush1.bf16.msra.mxu0 %v1588
    %1678 = vmatprep.subr.bf16.mxu0 0
    %1679 = vmatpush1.bf16.msra.mxu0 0
    %1680 = vmatprep.subr.bf16.mxu0 0
    %1681 = vmatpush1.bf16.msra.mxu0 0
    %1682 = vmatprep.subr.bf16.mxu0 0
    %1683 = vmatpush1.bf16.msra.mxu0 0
    %1684 = vmatprep.subr.bf16.mxu0 0
    %1685 = vmatpush1.bf16.msra.mxu0 0
    %1686 = vmatprep.subr.bf16.mxu0 0
    %1687 = vmatpush1.bf16.msra.mxu0 0
    %1688 = vmatprep.subr.bf16.mxu0 0
    %1689 = vmatpush1.bf16.msra.mxu0 0
    %1690 = vmatprep.subr.bf16.mxu0 0
    %1691 = vmatpush1.bf16.msra.mxu0 0
    %1692 = vmatprep.subr.bf16.mxu0 0
    %1693 = vmatpush1.bf16.msra.mxu0 0
    %1694 = vmatprep.mubr.bf16.mxu0 0
    %1695 = vmatmul.mubr.bf16.gmra.mrb[0].mxu0 %v1399
    %v1696 = vpop.f32.mrb[0].mxu0
    %v1697 = vadd.f32 %v1648, %v1696
    %v1698 = vpop.f32.mrb[0].mxu0
    %v1699 = vpop.f32.mrb[0].mxu0
    %v1700 = vadd.f32 %v1651, %v1699
    %v1701 = vpop.f32.mrb[0].mxu0
    %1702 = vmatprep.mubr.bf16.mxu0 0
    %1703 = vmatmul.mubr.bf16.gmra.mrb[0].mxu0 %v1407
    %v1704 = vpop.f32.mrb[0].mxu0
    %v1705 = vadd.f32 %v1656, %v1704
    %v1706 = vpop.f32.mrb[0].mxu0
    %v1707 = vpop.f32.mrb[0].mxu0
    %v1708 = vadd.f32 %v1659, %v1707
    %v1709 = vpop.f32.mrb[0].mxu0
    %1710 = vdwg.mxu0
    %v1711 = vmax.f32 %v1697, 0.0
    %v1712 = vmax.f32 %v1700, 0.0
    %v1713 = vmax.f32 %v1705, 0.0
    %v1714 = vmax.f32 %v1708, 0.0
    %v1715 = vadd.f32 %v1711, %v999
    %v1716 = vadd.f32 %v1712, %v1000
    %v1717 = vadd.f32 %v1713, %v1001
    %v1718 = vadd.f32 %v1714, %v1002
    %v1719 = vmax.f32 %v1715, 0.0
    %v1720 = vmax.f32 %v1716, 0.0
    %v1721 = vmax.f32 %v1717, 0.0
    %v1722 = vmax.f32 %v1718, 0.0
    %v1723 = vpack.c.bf16 %v1720, %v1719
    %v1724 = vpack.c.bf16 %v1722, %v1721
    %v1725 = vld [vmem:[#allocation14] sm:$0xf]
    %v1726 = vld [vmem:[#allocation14 + $0x4] sm:$0xf]
    %v1727 = vld [vmem:[#allocation14 + $0x8] sm:$0xf]
    %v1728 = vld [vmem:[#allocation14 + $0xc] sm:$0xf]
    %v1729 = vld [vmem:[#allocation14 + $0x10] sm:$0xf]
    %v1730 = vld [vmem:[#allocation14 + $0x14] sm:$0xf]
    %v1731 = vld [vmem:[#allocation14 + $0x18] sm:$0xf]
    %v1732 = vld [vmem:[#allocation14 + $0x1c] sm:$0xf]
    %v1733 = vld [vmem:[#allocation14 + $0x20] sm:$0xf]
    %v1734 = vld [vmem:[#allocation14 + $0x24] sm:$0xf]
    %v1735 = vld [vmem:[#allocation14 + $0x28] sm:$0xf]
    %v1736 = vld [vmem:[#allocation14 + $0x2c] sm:$0xf]
    %v1737 = vld [vmem:[#allocation14 + $0x30] sm:$0xf]
    %v1738 = vld [vmem:[#allocation14 + $0x34] sm:$0xf]
    %v1739 = vld [vmem:[#allocation14 + $0x38] sm:$0xf]
    %v1740 = vld [vmem:[#allocation14 + $0x3c] sm:$0xf]
    %v1741 = vld [vmem:[%s12] sm:$0x1]
    %v1743 = vlaneseq
    %v1744 = vshrl.u32 %v1743, 7
    %v1745 = vsub.s32 0, %v1744
    %v1746 = vrot.slane %v1741, %v1745
    %v1764 = vunpack.c.l.b16 %v1725
    %v1765 = vunpack.c.l.b16 %v1726
    %v1766 = vunpack.c.l.b16 %v1727
    %v1767 = vunpack.c.l.b16 %v1728
    %v1768 = vunpack.c.l.b16 %v1729
    %v1769 = vunpack.c.l.b16 %v1730
    %v1770 = vunpack.c.l.b16 %v1731
    %v1771 = vunpack.c.l.b16 %v1732
    %v1772 = vunpack.c.l.b16 %v1733
    %v1773 = vunpack.c.l.b16 %v1734
    %v1774 = vunpack.c.l.b16 %v1735
    %v1775 = vunpack.c.l.b16 %v1736
    %v1776 = vunpack.c.l.b16 %v1737
    %v1777 = vunpack.c.l.b16 %v1738
    %v1778 = vunpack.c.l.b16 %v1739
    %v1779 = vunpack.c.l.b16 %v1740
    %v1780 = vpack.c.b16 %v1765, %v1764
    %v1781 = vpack.c.b16 %v1767, %v1766
    %v1782 = vpack.c.b16 %v1769, %v1768
    %v1783 = vpack.c.b16 %v1771, %v1770
    %v1784 = vpack.c.b16 %v1773, %v1772
    %v1785 = vpack.c.b16 %v1775, %v1774
    %v1786 = vpack.c.b16 %v1777, %v1776
    %v1787 = vpack.c.b16 %v1779, %v1778
    %1796 = vmatprep.subr.bf16.mxu0 0
    %1797 = vmatpush1.bf16.msra.mxu0 %v1780
    %1798 = vmatprep.subr.bf16.mxu0 0
    %1799 = vmatpush1.bf16.msra.mxu0 %v1781
    %1800 = vmatprep.subr.bf16.mxu0 0
    %1801 = vmatpush1.bf16.msra.mxu0 %v1782
    %1802 = vmatprep.subr.bf16.mxu0 0
    %1803 = vmatpush1.bf16.msra.mxu0 %v1783
    %1804 = vmatprep.subr.bf16.mxu0 0
    %1805 = vmatpush1.bf16.msra.mxu0 %v1784
    %1806 = vmatprep.subr.bf16.mxu0 0
    %1807 = vmatpush1.bf16.msra.mxu0 %v1785
    %1808 = vmatprep.subr.bf16.mxu0 0
    %1809 = vmatpush1.bf16.msra.mxu0 %v1786
    %1810 = vmatprep.subr.bf16.mxu0 0
    %1811 = vmatpush1.bf16.msra.mxu0 %v1787
    %1812 = vmatprep.subr.bf16.mxu0 0
    %1813 = vmatpush1.bf16.msra.mxu0 0
    %1814 = vmatprep.subr.bf16.mxu0 0
    %1815 = vmatpush1.bf16.msra.mxu0 0
    %1816 = vmatprep.subr.bf16.mxu0 0
    %1817 = vmatpush1.bf16.msra.mxu0 0
    %1818 = vmatprep.subr.bf16.mxu0 0
    %1819 = vmatpush1.bf16.msra.mxu0 0
    %1820 = vmatprep.subr.bf16.mxu0 0
    %1821 = vmatpush1.bf16.msra.mxu0 0
    %1822 = vmatprep.subr.bf16.mxu0 0
    %1823 = vmatpush1.bf16.msra.mxu0 0
    %1824 = vmatprep.subr.bf16.mxu0 0
    %1825 = vmatpush1.bf16.msra.mxu0 0
    %1826 = vmatprep.subr.bf16.mxu0 0
    %1827 = vmatpush1.bf16.msra.mxu0 0
    %1828 = vmatprep.mubr.bf16.mxu0 0
    %1829 = vmatmul.mubr.bf16.gmra.mrb[0].mxu0 %v1723
    %v1830 = vpop.f32.mrb[0].mxu0
    %v1831 = vadd.f32 %v1746, %v1830
    %v1832 = vpop.f32.mrb[0].mxu0
    %v1833 = vpop.f32.mrb[0].mxu0
    %v1834 = vadd.f32 %v1746, %v1833
    %v1835 = vpop.f32.mrb[0].mxu0
    %1836 = vmatprep.mubr.bf16.mxu0 0
    %1837 = vmatmul.mubr.bf16.gmra.mrb[0].mxu0 %v1724
    %v1838 = vpop.f32.mrb[0].mxu0
    %v1839 = vadd.f32 %v1746, %v1838
    %v1840 = vpop.f32.mrb[0].mxu0
    %v1841 = vpop.f32.mrb[0].mxu0
    %v1842 = vadd.f32 %v1746, %v1841
    %v1843 = vpop.f32.mrb[0].mxu0
    %1844 = vdwg.mxu0
    %v1845 = vxor.u32 %v1831, 2147483648
    %v1846 = vxor.u32 %v1834, 2147483648
    %v1847 = vxor.u32 %v1839, 2147483648
    %v1848 = vxor.u32 %v1842, 2147483648
    %v1849 = vmul.f32 %v1845, 1.442695
    %v1850 = vpow.pop %v1849
    %v1851 = vmul.f32 %v1846, 1.442695
    %v1852 = vpow.pop %v1851
    %v1853 = vmul.f32 %v1847, 1.442695
    %v1854 = vpow.pop %v1853
    %v1855 = vmul.f32 %v1848, 1.442695
    %v1856 = vpow.pop %v1855
    %v1857 = vadd.f32 %v1850, 1.0
    %v1858 = vadd.f32 %v1852, 1.0
    %v1859 = vadd.f32 %v1854, 1.0
    %v1860 = vadd.f32 %v1856, 1.0
    %v1861 = vrcp.pop %v1857
    %v1862 = vmul.f32 1.0, %v1861
    %v1863 = vrcp.pop %v1858
    %v1864 = vmul.f32 1.0, %v1863
    %v1865 = vrcp.pop %v1859
    %v1866 = vmul.f32 1.0, %v1865
    %v1867 = vrcp.pop %v1860
    %v1868 = vmul.f32 1.0, %v1867
    %1869 = vst [vmem:[#allocation15] sm:$0xff] %v1862
    %1870 = vst [vmem:[#allocation15 + $0x8] sm:$0xff] %v1864
    %1871 = vst [vmem:[#allocation15 + $0x10] sm:$0xff] %v1866
    %1872 = vst [vmem:[#allocation15 + $0x18] sm:$0xff] %v1868
    // Predicated region
    $region82: #{tpu_custom_call.1} parent=1 // pred_check
      _
    $region83: #{tpu_custom_call.1} parent=1 // pred_check_branch
      %1874 = sbr.rel (0) target = $region85
    $region84: #{tpu_custom_call.1} parent=1 // pred_region
      %s1876 = ssub.s32 512, 512
      %1877 = vsyncadd [#allocation5], %s1876
      %s1878 = sshll.u32 [#allocation15], 4
      %s1879 = int_to_ptr.vmem [resolvable:$true] %s1878
      %1884 = dma.vmem_to_hbm [thread:$0]  %s1879, 512, %s13, [#allocation5], 128, 128, 8
    $region85: #{tpu_custom_call.1} parent=1 // pred_fallthru
      _
    // Predicated region
    $region86: #{tpu_custom_call.1} parent=1 // pred_check
      _
    $region87: #{tpu_custom_call.1} parent=1 // pred_check_branch
      %1886 = sbr.rel (0) target = $region89
    $region88: #{tpu_custom_call.1} parent=1 // pred_region
      %1887 = dma.done [#allocation5], 512
    $region89: #{tpu_custom_call.1} parent=1 // pred_fallthru
      _
    %1888 = vsyncpa [#allocation4], 1
    %1889 = vsyncpa [#allocation7], 1
    %1890 = vsyncpa [#allocation10], 1
    %1891 = vsyncpa [#allocation13], 1
    %1892 = vsyncpa [#allocation5], 1

</llo_original>
